<compile_context>
chip_gen: v5e
topology: v5e:2x2
jax: 0.10.0
libtpu: 0.0.40
codegen_flags: <defaults>
</compile_context>

<pallas_src>
import functools

import jax
import jax.numpy as jnp
from jax import lax
from jax.experimental import pallas as pl
from jax.experimental.pallas import tpu as pltpu


_CHANNELS = (1, 16, 32, 64, 128)   # conv channel plan of the Baseline module
_NUM_CLASSES = 2
_MXU = jnp.bfloat16                # matmul inputs; accumulation stays f32
_F32 = jnp.float32


# ------------------------------ shift helpers --------------------------------

def _row_prev(x):
    """out[r] = x[r-1] (wrapped row is masked by the caller)."""
    m, l = x.shape
    if m % 8 == 0:                                   # clean sublane rotate (XLU)
        return pltpu.roll(x, shift=1, axis=0)
    return jnp.concatenate([jnp.zeros((1, l), x.dtype), x[:m - 1, :]], axis=0)


def _row_next(x):
    """out[r] = x[r+1] (wrapped row is masked / never selected by the caller)."""
    m, l = x.shape
    if m % 8 == 0:
        return pltpu.roll(x, shift=m - 1, axis=0)    # == roll by -1
    return jnp.concatenate([x[1:, :], jnp.zeros((1, l), x.dtype)], axis=0)


def _lane_shift_left(x, c):
    """out[:, i] = x[:, i+c] (wrapped lanes are never selected by the caller)."""
    m, l = x.shape
    if l % 128 == 0 and 0 < c < l:
        return pltpu.roll(x, shift=l - c, axis=1)    # lane rotate (XLU)
    return jnp.concatenate([x[:, c:], x[:, :c]], axis=1)


# ------------------------------ fused kernel ---------------------------------

def _fused_cnn_kernel(chans,
                      x_ref,
                      w1_ref, b1_ref, m1_ref, r1_ref, l1_ref,
                      w2_ref, b2_ref, m2_ref, r2_ref, l2_ref,
                      w3_hbm, b3_ref, m3_ref, r3_ref, l3_ref,
                      w4_hbm, b4_ref, m4_ref,
                      gsel_ref, wl_ref, bl_ref,
                      o_ref,
                      w3_vmem, w4_vmem, dma_sem):
    # Kick off the conv3/conv4 weight DMAs immediately: they land in VMEM
    # while conv1/conv2/pool1 are computing (hides ~0.4 MB of HBM traffic).
    cp3 = pltpu.make_async_copy(w3_hbm, w3_vmem, dma_sem.at[0])
    cp4 = pltpu.make_async_copy(w4_hbm, w4_vmem, dma_sem.at[1])
    cp3.start()
    cp4.start()

    def conv3x3_relu(x, w_ref, b_ref, m_ref):
        # x: (M, W*Cin) f32, rows = (image, row), lanes = (col, channel).
        # All 9 taps in ONE matmul: vertical taps concatenated along lanes
        # (K = 3*W*Cin); horizontal taps + horizontal zero padding live in the
        # host-packed banded weight; vertical padding = precomputed row masks.
        x_dn = _row_prev(x) * m_ref[:, 0:1]          # x[r-1], zero at image top
        x_up = _row_next(x) * m_ref[:, 1:2]          # x[r+1], zero at image bottom
        xcat = jnp.concatenate([x_dn, x, x_up], axis=1).astype(_MXU)
        acc = jnp.dot(xcat, w_ref[...], preferred_element_type=_F32)
        return jnp.maximum(acc + b_ref[...], 0.0)    # f32 epilogue (v5e-safe)

    def maxpool2x2(y, c, sel_r_ref, sel_l_ref):
        # y: (M, W*c) f32 -> (M//2, (W//2)*c) f32, lane-dense throughout.
        vmax = jnp.maximum(y, _row_next(y))          # max(y[r], y[r+1]); odd rows unused
        vrows = jnp.dot(sel_r_ref[...], vmax.astype(_MXU),
                        preferred_element_type=_F32)            # keep rows 2q
        hmax = jnp.maximum(vrows, _lane_shift_left(vrows, c))   # max over column pair
        return jnp.dot(hmax.astype(_MXU), sel_l_ref[...],
                       preferred_element_type=_F32)             # keep columns 2q

    x = x_ref[...].astype(_F32)
    y = conv3x3_relu(x, w1_ref, b1_ref, m1_ref)
    y = maxpool2x2(y, chans[1], r1_ref, l1_ref)
    y = conv3x3_relu(y, w2_ref, b2_ref, m2_ref)
    y = maxpool2x2(y, chans[2], r2_ref, l2_ref)

    cp3.wait()                                       # conv3 weights now resident
    y = conv3x3_relu(y, w3_vmem, b3_ref, m3_ref)
    y = maxpool2x2(y, chans[3], r3_ref, l3_ref)

    cp4.wait()                                       # conv4 weights now resident
    y = conv3x3_relu(y, w4_vmem, b4_ref, m4_ref)

    # Global average pool + Linear head (GAP column-sum + precomputed per-image
    # averaging matrix, then the tiny linear projection), all in-kernel.
    c4 = chans[4]
    nblk = y.shape[1] // c4
    s = y[:, 0:c4]
    for j in range(1, nblk):                         # sum over columns (aligned slices)
        s = s + y[:, j * c4:(j + 1) * c4]
    # gsel already carries the 1/(H*W) averaging factor.
    feat = jnp.dot(gsel_ref[...], s.astype(_MXU), preferred_element_type=_F32)
    logits = jnp.dot(feat, wl_ref[...], preferred_element_type=_F32) + bl_ref[...]
    o_ref[...] = logits.astype(o_ref.dtype)


# ------------------------- host-side constant packing ------------------------

def _pack_conv_weights(w_hwio, w_spatial, dtype=_MXU):
    """(3,3,Cin,Cout) HWIO conv weight -> fused banded (3*W*Cin, W*Cout) matrix.

    The band structure encodes the horizontal taps AND horizontal zero padding;
    the three vertical taps are stacked along K so a 3x3 'same' conv is ONE
    lane-dense MXU matmul inside the kernel."""
    _, _, cin, cout = w_hwio.shape
    wp = jnp.arange(w_spatial)[:, None]              # input column  w'
    wo = jnp.arange(w_spatial)[None, :]              # output column w
    kw = wp - wo + 1
    valid = (kw >= 0) & (kw <= 2)
    g = w_hwio[:, jnp.clip(kw, 0, 2)]                # (3, w', w, cin, cout)
    g = jnp.where(valid[None, :, :, None, None], g, 0.0)
    g = jnp.transpose(g, (0, 1, 3, 2, 4))            # (3, w', cin, w, cout)
    return g.reshape(3 * w_spatial * cin, w_spatial * cout).astype(dtype)


def _pack_bias(b, w_spatial):
    # lane layout is (col, channel): bias tiled once per column, kept in f32
    return jnp.tile(b, w_spatial).reshape(1, -1).astype(_F32)


def _row_masks(n, h):
    # (n*h, 2) f32: col 0 masks the x[r-1] tap (top image row),
    #               col 1 masks the x[r+1] tap (bottom image row).
    r = jnp.arange(n * h) % h
    top = (r != 0).astype(_F32)
    bot = (r != h - 1).astype(_F32)
    return jnp.stack([top, bot], axis=1)


def _pool_row_select(n, h, dtype=_MXU):
    ho = h // 2
    ri = jnp.arange(n * ho)[:, None]
    ci = jnp.arange(n * h)[None, :]
    return (ci == 2 * ri).astype(dtype)              # (n*h/2, n*h)


def _pool_lane_select(w, c, dtype=_MXU):
    wo = w // 2
    li = jnp.arange(w * c)[:, None]
    lo = jnp.arange(wo * c)[None, :]
    return (li == lo + (lo // c) * c).astype(dtype)  # (w*c, (w/2)*c)


def _gap_select(n, h, w, dtype=_MXU):
    # (n, n*h) averaging matrix: picks the rows of image i and scales by 1/(h*w)
    ri = jnp.arange(n)[:, None]
    ci = jnp.arange(n * h)[None, :]
    return jnp.where(ci // h == ri, 1.0 / (h * w), 0.0).astype(dtype)


def pack_params(params, img_hw=16, batch=2):
    """One-time repack of conv/linear weights + selection/mask constants."""
    assert img_hw % 8 == 0, "need three 2x2 pools"
    c = _CHANNELS
    s1, s2, s3, s4 = img_hw, img_hw // 2, img_hw // 4, img_hw // 8
    return {
        "w1": _pack_conv_weights(params["w1"], s1), "b1": _pack_bias(params["b1"], s1),
        "m1": _row_masks(batch, s1),
        "r1": _pool_row_select(batch, s1), "l1": _pool_lane_select(s1, c[1]),
        "w2": _pack_conv_weights(params["w2"], s2), "b2": _pack_bias(params["b2"], s2),
        "m2": _row_masks(batch, s2),
        "r2": _pool_row_select(batch, s2), "l2": _pool_lane_select(s2, c[2]),
        "w3": _pack_conv_weights(params["w3"], s3), "b3": _pack_bias(params["b3"], s3),
        "m3": _row_masks(batch, s3),
        "r3": _pool_row_select(batch, s3), "l3": _pool_lane_select(s3, c[3]),
        "w4": _pack_conv_weights(params["w4"], s4), "b4": _pack_bias(params["b4"], s4),
        "m4": _row_masks(batch, s4),
        "g": _gap_select(batch, s4, s4),
        "wl": params["wl"].astype(_F32),
        "bl": params["bl"].reshape(1, -1).astype(_F32),
    }


# ------------------------------- forward pass ---------------------------------

def _full_spec(a):
    nd = a.ndim
    return pl.BlockSpec(a.shape, lambda *_: (0,) * nd)


@jax.jit
def baseline_forward(packed, x_nchw):
    n, cin, h, w = x_nchw.shape
    assert h == w and h % 8 == 0 and cin == _CHANNELS[0]
    assert packed["m1"].shape[0] == n * h, "pack_params batch/img_hw mismatch"
    # single layout transform of the tiny input: NCHW -> rows=(n,h), lanes=(w,cin)
    x2d = jnp.transpose(x_nchw, (0, 2, 3, 1)).reshape(n * h, w * cin).astype(_F32)

    args = (x2d,
            packed["w1"], packed["b1"], packed["m1"], packed["r1"], packed["l1"],
            packed["w2"], packed["b2"], packed["m2"], packed["r2"], packed["l2"],
            packed["w3"], packed["b3"], packed["m3"], packed["r3"], packed["l3"],
            packed["w4"], packed["b4"], packed["m4"],
            packed["g"], packed["wl"], packed["bl"])

    in_specs = [_full_spec(a) for a in args]
    # conv3 / conv4 weights stay in HBM; the kernel DMAs them into VMEM scratch
    # concurrently with the early layers.
    in_specs[11] = pl.BlockSpec(memory_space=pl.ANY)   # w3
    in_specs[16] = pl.BlockSpec(memory_space=pl.ANY)   # w4

    kernel = functools.partial(_fused_cnn_kernel, _CHANNELS)
    return pl.pallas_call(
        kernel,
        out_shape=jax.ShapeDtypeStruct((n, _NUM_CLASSES), _F32),
        grid=(1,),   # whole net in one VMEM-resident step; tile N*H rows if batch grows
        in_specs=in_specs,
        out_specs=pl.BlockSpec((n, _NUM_CLASSES), lambda i: (0, 0)),
        scratch_shapes=[
            pltpu.VMEM(packed["w3"].shape, _MXU),
            pltpu.VMEM(packed["w4"].shape, _MXU),
            pltpu.SemaphoreType.DMA((2,)),
        ],
        compiler_params=pltpu.CompilerParams(dimension_semantics=("arbitrary",)),
    )(*args)


# ------------------------------ params & reference ----------------------------

def init_params(key):
    ks = jax.random.split(key, 10)

    def conv_w(k, cin, cout):
        fan_in = 9 * cin
        return (jax.random.normal(k, (3, 3, cin, cout), jnp.float32)
                / jnp.sqrt(jnp.float32(fan_in)))

    def bias(k, cout, fan_in):
        return (jax.random.normal(k, (cout,), jnp.float32)
                / jnp.sqrt(jnp.float32(fan_in)))

    return {
        "w1": conv_w(ks[0], 1, 16),    "b1": bias(ks[1], 16, 9 * 1),
        "w2": conv_w(ks[2], 16, 32),   "b2": bias(ks[3], 32, 9 * 16),
        "w3": conv_w(ks[4], 32, 64),   "b3": bias(ks[5], 64, 9 * 32),
        "w4": conv_w(ks[6], 64, 128),  "b4": bias(ks[7], 128, 9 * 64),
        # PyTorch Linear(128, 2): stored transposed as (128, 2) so the head is x @ W
        "wl": (jax.random.normal(ks[8], (128, 2), jnp.float32)
               / jnp.sqrt(jnp.float32(128))),
        "bl": bias(ks[9], 2, 128),
    }


def baseline_reference(params, x_nchw):
    """Plain-JAX f32 reference of the PyTorch Baseline forward (for sanity)."""
    x = jnp.transpose(x_nchw, (0, 2, 3, 1)).astype(jnp.float32)    # NHWC

    def conv_relu(x, w, b):
        y = lax.conv_general_dilated(
            x, w, window_strides=(1, 1), padding="SAME",
            dimension_numbers=("NHWC", "HWIO", "NHWC"))
        return jnp.maximum(y + b, 0.0)

    def pool(x):
        n, h, w, c = x.shape
        return x.reshape(n, h // 2, 2, w // 2, 2, c).max(axis=(2, 4))

    x = pool(conv_relu(x, params["w1"], params["b1"]))
    x = pool(conv_relu(x, params["w2"], params["b2"]))
    x = pool(conv_relu(x, params["w3"], params["b3"]))
    x = conv_relu(x, params["w4"], params["b4"])
    feat = x.mean(axis=(1, 2))
    return feat @ params["wl"] + params["bl"]


# ---------------------------------- main ---------------------------------------

if __name__ == "__main__":
    key = jax.random.PRNGKey(0)
    pkey, xkey = jax.random.split(key)
    params = init_params(pkey)

    # Conv2d(1, ...) implies 1 input channel; 16x16 spatial -> 2x2 after 3 pools.
    x = jax.random.normal(xkey, (2, 1, 16, 16), jnp.float32)
    packed = pack_params(params, img_hw=16, batch=2)   # one-time repack, off hot path

    out = baseline_forward(packed, x)
    out = jax.block_until_ready(out)
    assert out.shape == (2, _NUM_CLASSES) and out.dtype == jnp.float32

    # sanity check vs an f32 reference (loose tolerance: conv matmuls run in bf16)
    ref = jax.jit(baseline_reference)(params, x)
    ref = jax.block_until_ready(ref)
    assert jnp.allclose(out, ref, atol=0.15, rtol=0.05), (out, ref)

    print("KERNEL_OK")
</pallas_src>

<mosaic_0001>
module attributes {stable_mosaic.version = 11 : i64} {
  func.func @_fused_cnn_kernel(%arg0: i32, %arg1: memref<32x16xf32, #tpu.memory_space<vmem>>, %arg2: memref<48x256xbf16, #tpu.memory_space<vmem>>, %arg3: memref<1x256xf32, #tpu.memory_space<vmem>>, %arg4: memref<32x2xf32, #tpu.memory_space<vmem>>, %arg5: memref<16x32xbf16, #tpu.memory_space<vmem>>, %arg6: memref<256x128xbf16, #tpu.memory_space<vmem>>, %arg7: memref<384x256xbf16, #tpu.memory_space<vmem>>, %arg8: memref<1x256xf32, #tpu.memory_space<vmem>>, %arg9: memref<16x2xf32, #tpu.memory_space<vmem>>, %arg10: memref<8x16xbf16, #tpu.memory_space<vmem>>, %arg11: memref<256x128xbf16, #tpu.memory_space<vmem>>, %arg12: memref<384x256xbf16, #tpu.memory_space<any>>, %arg13: memref<1x256xf32, #tpu.memory_space<vmem>>, %arg14: memref<8x2xf32, #tpu.memory_space<vmem>>, %arg15: memref<4x8xbf16, #tpu.memory_space<vmem>>, %arg16: memref<256x128xbf16, #tpu.memory_space<vmem>>, %arg17: memref<384x256xbf16, #tpu.memory_space<any>>, %arg18: memref<1x256xf32, #tpu.memory_space<vmem>>, %arg19: memref<4x2xf32, #tpu.memory_space<vmem>>, %arg20: memref<2x4xbf16, #tpu.memory_space<vmem>>, %arg21: memref<128x2xf32, #tpu.memory_space<vmem>>, %arg22: memref<1x2xf32, #tpu.memory_space<vmem>>, %arg23: memref<2x2xf32, #tpu.memory_space<vmem>>, %arg24: memref<384x256xbf16, #tpu.memory_space<vmem>>, %arg25: memref<384x256xbf16, #tpu.memory_space<vmem>>, %arg26: memref<2x!tpu.dma_semaphore, #tpu.memory_space<semaphore_mem>>) attributes {dimension_semantics = [#tpu.dimension_semantics<arbitrary>], iteration_bounds = array<i64: 1>, scalar_prefetch = 0 : i64, scratch_operands = 3 : i64, tpu.core_type = #tpu.core_type<tc>, window_params = [{pipeline_mode = #tpu.pipeline_mode<synchronous>, transform_indices = @transform_0, window_bounds = array<i64: 32, 16>}, {pipeline_mode = #tpu.pipeline_mode<synchronous>, transform_indices = @transform_1, window_bounds = array<i64: 48, 256>}, {pipeline_mode = #tpu.pipeline_mode<synchronous>, transform_indices = @transform_2, window_bounds = array<i64: 1, 256>}, {pipeline_mode = #tpu.pipeline_mode<synchronous>, transform_indices = @transform_3, window_bounds = array<i64: 32, 2>}, {pipeline_mode = #tpu.pipeline_mode<synchronous>, transform_indices = @transform_4, window_bounds = array<i64: 16, 32>}, {pipeline_mode = #tpu.pipeline_mode<synchronous>, transform_indices = @transform_5, window_bounds = array<i64: 256, 128>}, {pipeline_mode = #tpu.pipeline_mode<synchronous>, transform_indices = @transform_6, window_bounds = array<i64: 384, 256>}, {pipeline_mode = #tpu.pipeline_mode<synchronous>, transform_indices = @transform_7, window_bounds = array<i64: 1, 256>}, {pipeline_mode = #tpu.pipeline_mode<synchronous>, transform_indices = @transform_8, window_bounds = array<i64: 16, 2>}, {pipeline_mode = #tpu.pipeline_mode<synchronous>, transform_indices = @transform_9, window_bounds = array<i64: 8, 16>}, {pipeline_mode = #tpu.pipeline_mode<synchronous>, transform_indices = @transform_10, window_bounds = array<i64: 256, 128>}, {}, {pipeline_mode = #tpu.pipeline_mode<synchronous>, transform_indices = @transform_12, window_bounds = array<i64: 1, 256>}, {pipeline_mode = #tpu.pipeline_mode<synchronous>, transform_indices = @transform_13, window_bounds = array<i64: 8, 2>}, {pipeline_mode = #tpu.pipeline_mode<synchronous>, transform_indices = @transform_14, window_bounds = array<i64: 4, 8>}, {pipeline_mode = #tpu.pipeline_mode<synchronous>, transform_indices = @transform_15, window_bounds = array<i64: 256, 128>}, {}, {pipeline_mode = #tpu.pipeline_mode<synchronous>, transform_indices = @transform_17, window_bounds = array<i64: 1, 256>}, {pipeline_mode = #tpu.pipeline_mode<synchronous>, transform_indices = @transform_18, window_bounds = array<i64: 4, 2>}, {pipeline_mode = #tpu.pipeline_mode<synchronous>, transform_indices = @transform_19, window_bounds = array<i64: 2, 4>}, {pipeline_mode = #tpu.pipeline_mode<synchronous>, transform_indices = @transform_20, window_bounds = array<i64: 128, 2>}, {pipeline_mode = #tpu.pipeline_mode<synchronous>, transform_indices = @transform_21, window_bounds = array<i64: 1, 2>}, {pipeline_mode = #tpu.pipeline_mode<synchronous>, transform_indices = @transform_22, window_bounds = array<i64: 2, 2>}]} {
    %c0_i32 = arith.constant 0 : i32
    %0 = tpu.memref_slice %arg26[%c0_i32] : memref<2x!tpu.dma_semaphore, #tpu.memory_space<semaphore_mem>> -> memref<1x!tpu.dma_semaphore, #tpu.memory_space<semaphore_mem>>
    %1 = tpu.memref_squeeze %0 : memref<1x!tpu.dma_semaphore, #tpu.memory_space<semaphore_mem>> -> memref<!tpu.dma_semaphore, #tpu.memory_space<semaphore_mem>>
    tpu.enqueue_dma source(%arg12 : memref<384x256xbf16, #tpu.memory_space<any>>) target(%arg24 : memref<384x256xbf16, #tpu.memory_space<vmem>>) target_semaphore(%1 : memref<!tpu.dma_semaphore, #tpu.memory_space<semaphore_mem>>)
    %c1_i32 = arith.constant 1 : i32
    %2 = tpu.memref_slice %arg26[%c1_i32] : memref<2x!tpu.dma_semaphore, #tpu.memory_space<semaphore_mem>> -> memref<1x!tpu.dma_semaphore, #tpu.memory_space<semaphore_mem>>
    %3 = tpu.memref_squeeze %2 : memref<1x!tpu.dma_semaphore, #tpu.memory_space<semaphore_mem>> -> memref<!tpu.dma_semaphore, #tpu.memory_space<semaphore_mem>>
    tpu.enqueue_dma source(%arg17 : memref<384x256xbf16, #tpu.memory_space<any>>) target(%arg25 : memref<384x256xbf16, #tpu.memory_space<vmem>>) target_semaphore(%3 : memref<!tpu.dma_semaphore, #tpu.memory_space<semaphore_mem>>)
    %c0 = arith.constant 0 : index
    %c0_0 = arith.constant 0 : index
    %4 = vector.load %arg1[%c0, %c0_0] : memref<32x16xf32, #tpu.memory_space<vmem>>, vector<32x16xf32>
    %c1_i32_1 = arith.constant 1 : i32
    %5 = tpu.dynamic_rotate %4 by %c1_i32_1 dim 0 : vector<32x16xf32>, i32 -> vector<32x16xf32>
    %c0_2 = arith.constant 0 : index
    %c0_3 = arith.constant 0 : index
    %6 = vector.load %arg4[%c0_2, %c0_3] : memref<32x2xf32, #tpu.memory_space<vmem>>, vector<32x1xf32>
    %7 = vector.broadcast %6 : vector<32x1xf32> to vector<32x16xf32>
    %8 = arith.mulf %5, %7 : vector<32x16xf32>
    %c31_i32 = arith.constant 31 : i32
    %9 = tpu.dynamic_rotate %4 by %c31_i32 dim 0 : vector<32x16xf32>, i32 -> vector<32x16xf32>
    %c0_4 = arith.constant 0 : index
    %c1 = arith.constant 1 : index
    %10 = vector.load %arg4[%c0_4, %c1] : memref<32x2xf32, #tpu.memory_space<vmem>>, vector<32x1xf32>
    %11 = vector.broadcast %10 : vector<32x1xf32> to vector<32x16xf32>
    %12 = arith.mulf %9, %11 : vector<32x16xf32>
    %13 = tpu.concatenate %8, %4, %12 in 1 : vector<32x16xf32>, vector<32x16xf32>, vector<32x16xf32> -> vector<32x48xf32>
    %14 = arith.truncf %13 : vector<32x48xf32> to vector<32x48xbf16>
    %c0_5 = arith.constant 0 : index
    %c0_6 = arith.constant 0 : index
    %15 = vector.load %arg2[%c0_5, %c0_6] : memref<48x256xbf16, #tpu.memory_space<vmem>>, vector<48x256xbf16>
    %cst = arith.constant dense<0.000000e+00> : vector<32x256xf32>
    %16 = tpu.matmul %14, %15, %cst {dimension_numbers = #tpu.dot_dimension_numbers<[1], [0], [0], [1], [0, 0, 1, 1], [], []>} : vector<32x48xbf16>, vector<48x256xbf16>, vector<32x256xf32> -> vector<32x256xf32>
    %c0_7 = arith.constant 0 : index
    %c0_8 = arith.constant 0 : index
    %17 = vector.load %arg3[%c0_7, %c0_8] : memref<1x256xf32, #tpu.memory_space<vmem>>, vector<1x256xf32>
    %18 = vector.broadcast %17 : vector<1x256xf32> to vector<32x256xf32>
    %19 = arith.addf %16, %18 : vector<32x256xf32>
    %cst_9 = arith.constant 0.000000e+00 : f32
    %20 = vector.broadcast %cst_9 : f32 to vector<32x256xf32>
    %21 = arith.maximumf %19, %20 : vector<32x256xf32>
    %c31_i32_10 = arith.constant 31 : i32
    %22 = tpu.dynamic_rotate %21 by %c31_i32_10 dim 0 : vector<32x256xf32>, i32 -> vector<32x256xf32>
    %23 = arith.maximumf %21, %22 : vector<32x256xf32>
    %c0_11 = arith.constant 0 : index
    %c0_12 = arith.constant 0 : index
    %24 = vector.load %arg5[%c0_11, %c0_12] : memref<16x32xbf16, #tpu.memory_space<vmem>>, vector<16x32xbf16>
    %25 = arith.truncf %23 : vector<32x256xf32> to vector<32x256xbf16>
    %cst_13 = arith.constant dense<0.000000e+00> : vector<16x256xf32>
    %26 = tpu.matmul %24, %25, %cst_13 {dimension_numbers = #tpu.dot_dimension_numbers<[1], [0], [0], [1], [0, 0, 1, 1], [], []>} : vector<16x32xbf16>, vector<32x256xbf16>, vector<16x256xf32> -> vector<16x256xf32>
    %c240_i32 = arith.constant 240 : i32
    %27 = tpu.dynamic_rotate %26 by %c240_i32 dim 1 : vector<16x256xf32>, i32 -> vector<16x256xf32>
    %28 = arith.maximumf %26, %27 : vector<16x256xf32>
    %29 = arith.truncf %28 : vector<16x256xf32> to vector<16x256xbf16>
    %c0_14 = arith.constant 0 : index
    %c0_15 = arith.constant 0 : index
    %30 = vector.load %arg6[%c0_14, %c0_15] : memref<256x128xbf16, #tpu.memory_space<vmem>>, vector<256x128xbf16>
    %cst_16 = arith.constant dense<0.000000e+00> : vector<16x128xf32>
    %31 = tpu.matmul %29, %30, %cst_16 {dimension_numbers = #tpu.dot_dimension_numbers<[1], [0], [0], [1], [0, 0, 1, 1], [], []>} : vector<16x256xbf16>, vector<256x128xbf16>, vector<16x128xf32> -> vector<16x128xf32>
    %c1_i32_17 = arith.constant 1 : i32
    %32 = tpu.dynamic_rotate %31 by %c1_i32_17 dim 0 : vector<16x128xf32>, i32 -> vector<16x128xf32>
    %c0_18 = arith.constant 0 : index
    %c0_19 = arith.constant 0 : index
    %33 = vector.load %arg9[%c0_18, %c0_19] : memref<16x2xf32, #tpu.memory_space<vmem>>, vector<16x1xf32>
    %34 = vector.broadcast %33 : vector<16x1xf32> to vector<16x128xf32>
    %35 = arith.mulf %32, %34 : vector<16x128xf32>
    %c15_i32 = arith.constant 15 : i32
    %36 = tpu.dynamic_rotate %31 by %c15_i32 dim 0 : vector<16x128xf32>, i32 -> vector<16x128xf32>
    %c0_20 = arith.constant 0 : index
    %c1_21 = arith.constant 1 : index
    %37 = vector.load %arg9[%c0_20, %c1_21] : memref<16x2xf32, #tpu.memory_space<vmem>>, vector<16x1xf32>
    %38 = vector.broadcast %37 : vector<16x1xf32> to vector<16x128xf32>
    %39 = arith.mulf %36, %38 : vector<16x128xf32>
    %40 = tpu.concatenate %35, %31, %39 in 1 : vector<16x128xf32>, vector<16x128xf32>, vector<16x128xf32> -> vector<16x384xf32>
    %41 = arith.truncf %40 : vector<16x384xf32> to vector<16x384xbf16>
    %c0_22 = arith.constant 0 : index
    %c0_23 = arith.constant 0 : index
    %42 = vector.load %arg7[%c0_22, %c0_23] : memref<384x256xbf16, #tpu.memory_space<vmem>>, vector<384x256xbf16>
    %cst_24 = arith.constant dense<0.000000e+00> : vector<16x256xf32>
    %43 = tpu.matmul %41, %42, %cst_24 {dimension_numbers = #tpu.dot_dimension_numbers<[1], [0], [0], [1], [0, 0, 1, 1], [], []>} : vector<16x384xbf16>, vector<384x256xbf16>, vector<16x256xf32> -> vector<16x256xf32>
    %c0_25 = arith.constant 0 : index
    %c0_26 = arith.constant 0 : index
    %44 = vector.load %arg8[%c0_25, %c0_26] : memref<1x256xf32, #tpu.memory_space<vmem>>, vector<1x256xf32>
    %45 = vector.broadcast %44 : vector<1x256xf32> to vector<16x256xf32>
    %46 = arith.addf %43, %45 : vector<16x256xf32>
    %cst_27 = arith.constant 0.000000e+00 : f32
    %47 = vector.broadcast %cst_27 : f32 to vector<16x256xf32>
    %48 = arith.maximumf %46, %47 : vector<16x256xf32>
    %c15_i32_28 = arith.constant 15 : i32
    %49 = tpu.dynamic_rotate %48 by %c15_i32_28 dim 0 : vector<16x256xf32>, i32 -> vector<16x256xf32>
    %50 = arith.maximumf %48, %49 : vector<16x256xf32>
    %c0_29 = arith.constant 0 : index
    %c0_30 = arith.constant 0 : index
    %51 = vector.load %arg10[%c0_29, %c0_30] : memref<8x16xbf16, #tpu.memory_space<vmem>>, vector<8x16xbf16>
    %52 = arith.truncf %50 : vector<16x256xf32> to vector<16x256xbf16>
    %cst_31 = arith.constant dense<0.000000e+00> : vector<8x256xf32>
    %53 = tpu.matmul %51, %52, %cst_31 {dimension_numbers = #tpu.dot_dimension_numbers<[1], [0], [0], [1], [0, 0, 1, 1], [], []>} : vector<8x16xbf16>, vector<16x256xbf16>, vector<8x256xf32> -> vector<8x256xf32>
    %c224_i32 = arith.constant 224 : i32
    %54 = tpu.dynamic_rotate %53 by %c224_i32 dim 1 : vector<8x256xf32>, i32 -> vector<8x256xf32>
    %55 = arith.maximumf %53, %54 : vector<8x256xf32>
    %56 = arith.truncf %55 : vector<8x256xf32> to vector<8x256xbf16>
    %c0_32 = arith.constant 0 : index
    %c0_33 = arith.constant 0 : index
    %57 = vector.load %arg11[%c0_32, %c0_33] : memref<256x128xbf16, #tpu.memory_space<vmem>>, vector<256x128xbf16>
    %cst_34 = arith.constant dense<0.000000e+00> : vector<8x128xf32>
    %58 = tpu.matmul %56, %57, %cst_34 {dimension_numbers = #tpu.dot_dimension_numbers<[1], [0], [0], [1], [0, 0, 1, 1], [], []>} : vector<8x256xbf16>, vector<256x128xbf16>, vector<8x128xf32> -> vector<8x128xf32>
    %c0_i32_35 = arith.constant 0 : i32
    %59 = tpu.memref_slice %arg26[%c0_i32_35] : memref<2x!tpu.dma_semaphore, #tpu.memory_space<semaphore_mem>> -> memref<1x!tpu.dma_semaphore, #tpu.memory_space<semaphore_mem>>
    %60 = tpu.memref_squeeze %59 : memref<1x!tpu.dma_semaphore, #tpu.memory_space<semaphore_mem>> -> memref<!tpu.dma_semaphore, #tpu.memory_space<semaphore_mem>>
    tpu.wait_dma2 semaphore(%60 : memref<!tpu.dma_semaphore, #tpu.memory_space<semaphore_mem>>) src(%arg12 : memref<384x256xbf16, #tpu.memory_space<any>>) dst(%arg24 : memref<384x256xbf16, #tpu.memory_space<vmem>>)
    %c1_i32_36 = arith.constant 1 : i32
    %61 = tpu.dynamic_rotate %58 by %c1_i32_36 dim 0 : vector<8x128xf32>, i32 -> vector<8x128xf32>
    %c0_37 = arith.constant 0 : index
    %c0_38 = arith.constant 0 : index
    %62 = vector.load %arg14[%c0_37, %c0_38] : memref<8x2xf32, #tpu.memory_space<vmem>>, vector<8x1xf32>
    %63 = vector.broadcast %62 : vector<8x1xf32> to vector<8x128xf32>
    %64 = arith.mulf %61, %63 : vector<8x128xf32>
    %c7_i32 = arith.constant 7 : i32
    %65 = tpu.dynamic_rotate %58 by %c7_i32 dim 0 : vector<8x128xf32>, i32 -> vector<8x128xf32>
    %c0_39 = arith.constant 0 : index
    %c1_40 = arith.constant 1 : index
    %66 = vector.load %arg14[%c0_39, %c1_40] : memref<8x2xf32, #tpu.memory_space<vmem>>, vector<8x1xf32>
    %67 = vector.broadcast %66 : vector<8x1xf32> to vector<8x128xf32>
    %68 = arith.mulf %65, %67 : vector<8x128xf32>
    %69 = tpu.concatenate %64, %58, %68 in 1 : vector<8x128xf32>, vector<8x128xf32>, vector<8x128xf32> -> vector<8x384xf32>
    %70 = arith.truncf %69 : vector<8x384xf32> to vector<8x384xbf16>
    %c0_41 = arith.constant 0 : index
    %c0_42 = arith.constant 0 : index
    %71 = vector.load %arg24[%c0_41, %c0_42] : memref<384x256xbf16, #tpu.memory_space<vmem>>, vector<384x256xbf16>
    %cst_43 = arith.constant dense<0.000000e+00> : vector<8x256xf32>
    %72 = tpu.matmul %70, %71, %cst_43 {dimension_numbers = #tpu.dot_dimension_numbers<[1], [0], [0], [1], [0, 0, 1, 1], [], []>} : vector<8x384xbf16>, vector<384x256xbf16>, vector<8x256xf32> -> vector<8x256xf32>
    %c0_44 = arith.constant 0 : index
    %c0_45 = arith.constant 0 : index
    %73 = vector.load %arg13[%c0_44, %c0_45] : memref<1x256xf32, #tpu.memory_space<vmem>>, vector<1x256xf32>
    %74 = vector.broadcast %73 : vector<1x256xf32> to vector<8x256xf32>
    %75 = arith.addf %72, %74 : vector<8x256xf32>
    %cst_46 = arith.constant 0.000000e+00 : f32
    %76 = vector.broadcast %cst_46 : f32 to vector<8x256xf32>
    %77 = arith.maximumf %75, %76 : vector<8x256xf32>
    %c7_i32_47 = arith.constant 7 : i32
    %78 = tpu.dynamic_rotate %77 by %c7_i32_47 dim 0 : vector<8x256xf32>, i32 -> vector<8x256xf32>
    %79 = arith.maximumf %77, %78 : vector<8x256xf32>
    %c0_48 = arith.constant 0 : index
    %c0_49 = arith.constant 0 : index
    %80 = vector.load %arg15[%c0_48, %c0_49] : memref<4x8xbf16, #tpu.memory_space<vmem>>, vector<4x8xbf16>
    %81 = arith.truncf %79 : vector<8x256xf32> to vector<8x256xbf16>
    %cst_50 = arith.constant dense<0.000000e+00> : vector<4x256xf32>
    %82 = tpu.matmul %80, %81, %cst_50 {dimension_numbers = #tpu.dot_dimension_numbers<[1], [0], [0], [1], [0, 0, 1, 1], [], []>} : vector<4x8xbf16>, vector<8x256xbf16>, vector<4x256xf32> -> vector<4x256xf32>
    %c192_i32 = arith.constant 192 : i32
    %83 = tpu.dynamic_rotate %82 by %c192_i32 dim 1 : vector<4x256xf32>, i32 -> vector<4x256xf32>
    %84 = arith.maximumf %82, %83 : vector<4x256xf32>
    %85 = arith.truncf %84 : vector<4x256xf32> to vector<4x256xbf16>
    %c0_51 = arith.constant 0 : index
    %c0_52 = arith.constant 0 : index
    %86 = vector.load %arg16[%c0_51, %c0_52] : memref<256x128xbf16, #tpu.memory_space<vmem>>, vector<256x128xbf16>
    %cst_53 = arith.constant dense<0.000000e+00> : vector<4x128xf32>
    %87 = tpu.matmul %85, %86, %cst_53 {dimension_numbers = #tpu.dot_dimension_numbers<[1], [0], [0], [1], [0, 0, 1, 1], [], []>} : vector<4x256xbf16>, vector<256x128xbf16>, vector<4x128xf32> -> vector<4x128xf32>
    %c1_i32_54 = arith.constant 1 : i32
    %88 = tpu.memref_slice %arg26[%c1_i32_54] : memref<2x!tpu.dma_semaphore, #tpu.memory_space<semaphore_mem>> -> memref<1x!tpu.dma_semaphore, #tpu.memory_space<semaphore_mem>>
    %89 = tpu.memref_squeeze %88 : memref<1x!tpu.dma_semaphore, #tpu.memory_space<semaphore_mem>> -> memref<!tpu.dma_semaphore, #tpu.memory_space<semaphore_mem>>
    tpu.wait_dma2 semaphore(%89 : memref<!tpu.dma_semaphore, #tpu.memory_space<semaphore_mem>>) src(%arg17 : memref<384x256xbf16, #tpu.memory_space<any>>) dst(%arg25 : memref<384x256xbf16, #tpu.memory_space<vmem>>)
    %cst_55 = arith.constant 0.000000e+00 : f32
    %90 = vector.broadcast %cst_55 : f32 to vector<1x128xf32>
    %91 = vector.extract_strided_slice %87 {offsets = [0, 0], sizes = [3, 128], strides = [1, 1]} : vector<4x128xf32> to vector<3x128xf32>
    %92 = tpu.concatenate %90, %91 in 0 : vector<1x128xf32>, vector<3x128xf32> -> vector<4x128xf32>
    %c0_56 = arith.constant 0 : index
    %c0_57 = arith.constant 0 : index
    %93 = vector.load %arg19[%c0_56, %c0_57] : memref<4x2xf32, #tpu.memory_space<vmem>>, vector<4x1xf32>
    %94 = vector.broadcast %93 : vector<4x1xf32> to vector<4x128xf32>
    %95 = arith.mulf %92, %94 : vector<4x128xf32>
    %96 = vector.extract_strided_slice %87 {offsets = [1, 0], sizes = [3, 128], strides = [1, 1]} : vector<4x128xf32> to vector<3x128xf32>
    %cst_58 = arith.constant 0.000000e+00 : f32
    %97 = vector.broadcast %cst_58 : f32 to vector<1x128xf32>
    %98 = tpu.concatenate %96, %97 in 0 : vector<3x128xf32>, vector<1x128xf32> -> vector<4x128xf32>
    %c0_59 = arith.constant 0 : index
    %c1_60 = arith.constant 1 : index
    %99 = vector.load %arg19[%c0_59, %c1_60] : memref<4x2xf32, #tpu.memory_space<vmem>>, vector<4x1xf32>
    %100 = vector.broadcast %99 : vector<4x1xf32> to vector<4x128xf32>
    %101 = arith.mulf %98, %100 : vector<4x128xf32>
    %102 = tpu.concatenate %95, %87, %101 in 1 : vector<4x128xf32>, vector<4x128xf32>, vector<4x128xf32> -> vector<4x384xf32>
    %103 = arith.truncf %102 : vector<4x384xf32> to vector<4x384xbf16>
    %c0_61 = arith.constant 0 : index
    %c0_62 = arith.constant 0 : index
    %104 = vector.load %arg25[%c0_61, %c0_62] : memref<384x256xbf16, #tpu.memory_space<vmem>>, vector<384x256xbf16>
    %cst_63 = arith.constant dense<0.000000e+00> : vector<4x256xf32>
    %105 = tpu.matmul %103, %104, %cst_63 {dimension_numbers = #tpu.dot_dimension_numbers<[1], [0], [0], [1], [0, 0, 1, 1], [], []>} : vector<4x384xbf16>, vector<384x256xbf16>, vector<4x256xf32> -> vector<4x256xf32>
    %c0_64 = arith.constant 0 : index
    %c0_65 = arith.constant 0 : index
    %106 = vector.load %arg18[%c0_64, %c0_65] : memref<1x256xf32, #tpu.memory_space<vmem>>, vector<1x256xf32>
    %107 = vector.broadcast %106 : vector<1x256xf32> to vector<4x256xf32>
    %108 = arith.addf %105, %107 : vector<4x256xf32>
    %cst_66 = arith.constant 0.000000e+00 : f32
    %109 = vector.broadcast %cst_66 : f32 to vector<4x256xf32>
    %110 = arith.maximumf %108, %109 : vector<4x256xf32>
    %111 = vector.extract_strided_slice %110 {offsets = [0, 0], sizes = [4, 128], strides = [1, 1]} : vector<4x256xf32> to vector<4x128xf32>
    %112 = vector.extract_strided_slice %110 {offsets = [0, 128], sizes = [4, 128], strides = [1, 1]} : vector<4x256xf32> to vector<4x128xf32>
    %113 = arith.addf %111, %112 : vector<4x128xf32>
    %c0_67 = arith.constant 0 : index
    %c0_68 = arith.constant 0 : index
    %114 = vector.load %arg20[%c0_67, %c0_68] : memref<2x4xbf16, #tpu.memory_space<vmem>>, vector<2x4xbf16>
    %115 = arith.truncf %113 : vector<4x128xf32> to vector<4x128xbf16>
    %cst_69 = arith.constant dense<0.000000e+00> : vector<2x128xf32>
    %116 = tpu.matmul %114, %115, %cst_69 {dimension_numbers = #tpu.dot_dimension_numbers<[1], [0], [0], [1], [0, 0, 1, 1], [], []>} : vector<2x4xbf16>, vector<4x128xbf16>, vector<2x128xf32> -> vector<2x128xf32>
    %c0_70 = arith.constant 0 : index
    %c0_71 = arith.constant 0 : index
    %117 = vector.load %arg21[%c0_70, %c0_71] : memref<128x2xf32, #tpu.memory_space<vmem>>, vector<128x2xf32>
    %cst_72 = arith.constant dense<0.000000e+00> : vector<2x2xf32>
    %118 = tpu.matmul %116, %117, %cst_72 {dimension_numbers = #tpu.dot_dimension_numbers<[1], [0], [0], [1], [0, 0, 1, 1], [], []>} : vector<2x128xf32>, vector<128x2xf32>, vector<2x2xf32> -> vector<2x2xf32>
    %c0_73 = arith.constant 0 : index
    %c0_74 = arith.constant 0 : index
    %119 = vector.load %arg22[%c0_73, %c0_74] : memref<1x2xf32, #tpu.memory_space<vmem>>, vector<1x2xf32>
    %120 = vector.broadcast %119 : vector<1x2xf32> to vector<2x2xf32>
    %121 = arith.addf %118, %120 : vector<2x2xf32>
    %c0_75 = arith.constant 0 : index
    %c0_76 = arith.constant 0 : index
    %122 = vector.load %arg23[%c0_75, %c0_76] : memref<2x2xf32, #tpu.memory_space<vmem>>, vector<2x2xf32>
    tpu.vector_store %arg23[%c0_75, %c0_76], %121 {strides = array<i32>} : memref<2x2xf32, #tpu.memory_space<vmem>>, vector<2x2xf32>,
    return
  }
  func.func @transform_0(%arg0: i32) -> (i32, i32) {
    %c0_i32 = arith.constant 0 : i32
    %c0_i32_0 = arith.constant 0 : i32
    %c0_i32_1 = arith.constant 0 : i32
    return %c0_i32, %c0_i32_0 : i32, i32
  }
  func.func @transform_1(%arg0: i32) -> (i32, i32) {
    %c0_i32 = arith.constant 0 : i32
    %c0_i32_0 = arith.constant 0 : i32
    %c0_i32_1 = arith.constant 0 : i32
    return %c0_i32, %c0_i32_0 : i32, i32
  }
  func.func @transform_2(%arg0: i32) -> (i32, i32) {
    %c0_i32 = arith.constant 0 : i32
    %c0_i32_0 = arith.constant 0 : i32
    %c0_i32_1 = arith.constant 0 : i32
    return %c0_i32, %c0_i32_0 : i32, i32
  }
  func.func @transform_3(%arg0: i32) -> (i32, i32) {
    %c0_i32 = arith.constant 0 : i32
    %c0_i32_0 = arith.constant 0 : i32
    %c0_i32_1 = arith.constant 0 : i32
    return %c0_i32, %c0_i32_0 : i32, i32
  }
  func.func @transform_4(%arg0: i32) -> (i32, i32) {
    %c0_i32 = arith.constant 0 : i32
    %c0_i32_0 = arith.constant 0 : i32
    %c0_i32_1 = arith.constant 0 : i32
    return %c0_i32, %c0_i32_0 : i32, i32
  }
  func.func @transform_5(%arg0: i32) -> (i32, i32) {
    %c0_i32 = arith.constant 0 : i32
    %c0_i32_0 = arith.constant 0 : i32
    %c0_i32_1 = arith.constant 0 : i32
    return %c0_i32, %c0_i32_0 : i32, i32
  }
  func.func @transform_6(%arg0: i32) -> (i32, i32) {
    %c0_i32 = arith.constant 0 : i32
    %c0_i32_0 = arith.constant 0 : i32
    %c0_i32_1 = arith.constant 0 : i32
    return %c0_i32, %c0_i32_0 : i32, i32
  }
  func.func @transform_7(%arg0: i32) -> (i32, i32) {
    %c0_i32 = arith.constant 0 : i32
    %c0_i32_0 = arith.constant 0 : i32
    %c0_i32_1 = arith.constant 0 : i32
    return %c0_i32, %c0_i32_0 : i32, i32
  }
  func.func @transform_8(%arg0: i32) -> (i32, i32) {
    %c0_i32 = arith.constant 0 : i32
    %c0_i32_0 = arith.constant 0 : i32
    %c0_i32_1 = arith.constant 0 : i32
    return %c0_i32, %c0_i32_0 : i32, i32
  }
  func.func @transform_9(%arg0: i32) -> (i32, i32) {
    %c0_i32 = arith.constant 0 : i32
    %c0_i32_0 = arith.constant 0 : i32
    %c0_i32_1 = arith.constant 0 : i32
    return %c0_i32, %c0_i32_0 : i32, i32
  }
  func.func @transform_10(%arg0: i32) -> (i32, i32) {
    %c0_i32 = arith.constant 0 : i32
    %c0_i32_0 = arith.constant 0 : i32
    %c0_i32_1 = arith.constant 0 : i32
    return %c0_i32, %c0_i32_0 : i32, i32
  }
  func.func @transform_12(%arg0: i32) -> (i32, i32) {
    %c0_i32 = arith.constant 0 : i32
    %c0_i32_0 = arith.constant 0 : i32
    %c0_i32_1 = arith.constant 0 : i32
    return %c0_i32, %c0_i32_0 : i32, i32
  }
  func.func @transform_13(%arg0: i32) -> (i32, i32) {
    %c0_i32 = arith.constant 0 : i32
    %c0_i32_0 = arith.constant 0 : i32
    %c0_i32_1 = arith.constant 0 : i32
    return %c0_i32, %c0_i32_0 : i32, i32
  }
  func.func @transform_14(%arg0: i32) -> (i32, i32) {
    %c0_i32 = arith.constant 0 : i32
    %c0_i32_0 = arith.constant 0 : i32
    %c0_i32_1 = arith.constant 0 : i32
    return %c0_i32, %c0_i32_0 : i32, i32
  }
  func.func @transform_15(%arg0: i32) -> (i32, i32) {
    %c0_i32 = arith.constant 0 : i32
    %c0_i32_0 = arith.constant 0 : i32
    %c0_i32_1 = arith.constant 0 : i32
    return %c0_i32, %c0_i32_0 : i32, i32
  }
  func.func @transform_17(%arg0: i32) -> (i32, i32) {
    %c0_i32 = arith.constant 0 : i32
    %c0_i32_0 = arith.constant 0 : i32
    %c0_i32_1 = arith.constant 0 : i32
    return %c0_i32, %c0_i32_0 : i32, i32
  }
  func.func @transform_18(%arg0: i32) -> (i32, i32) {
    %c0_i32 = arith.constant 0 : i32
    %c0_i32_0 = arith.constant 0 : i32
    %c0_i32_1 = arith.constant 0 : i32
    return %c0_i32, %c0_i32_0 : i32, i32
  }
  func.func @transform_19(%arg0: i32) -> (i32, i32) {
    %c0_i32 = arith.constant 0 : i32
    %c0_i32_0 = arith.constant 0 : i32
    %c0_i32_1 = arith.constant 0 : i32
    return %c0_i32, %c0_i32_0 : i32, i32
  }
  func.func @transform_20(%arg0: i32) -> (i32, i32) {
    %c0_i32 = arith.constant 0 : i32
    %c0_i32_0 = arith.constant 0 : i32
    %c0_i32_1 = arith.constant 0 : i32
    return %c0_i32, %c0_i32_0 : i32, i32
  }
  func.func @transform_21(%arg0: i32) -> (i32, i32) {
    %c0_i32 = arith.constant 0 : i32
    %c0_i32_0 = arith.constant 0 : i32
    %c0_i32_1 = arith.constant 0 : i32
    return %c0_i32, %c0_i32_0 : i32, i32
  }
  func.func @transform_22(%arg0: i32) -> (i32, i32) {
    %c0_i32 = arith.constant 0 : i32
    %c0_i32_0 = arith.constant 0 : i32
    %c0_i32_1 = arith.constant 0 : i32
    return %c0_i32, %c0_i32_0 : i32, i32
  }
}

</mosaic_0001>

<llo_original>
// kernel: baseline_forward.1
$region0: #{baseline_forward.1}
  #allocation0 [shape = 'u32[]', space=smem, size = 0x4, offset = 0x4, fixed_abs, tag = 'smem constant byte address 0x4 - core index']
  #allocation1 [shape = 'u32[72,128]{1,0:T(1,128)}', space=vmem, size = 0x9000, scoped, tag = 'internal scratch']
  #allocation2 [shape = 'bf16[384,256]{1,0:T(8,128)(2,1)}', space=vmem, size = 0x30000, scoped, tag = 'scratch operand']
  #allocation3 [shape = 'bf16[384,256]{1,0:T(8,128)(2,1)}', space=vmem, size = 0x30000, scoped, tag = 'scratch operand']
  #allocation4 [shape = 's32[2]{0}', space=sflag, size = 0x8, scoped, tag = 'scratch operand']
  #allocation20 [shape = 's32[]', space=sflag, size = 0x4, offset = 0, fixed_abs, tag = 'sflag constant byte address 0x0 - dummy sync flag']
  #allocation21 [shape = 's32[]', space=sflag, size = 0x4, offset = 0, fixed_abs, tag = 'sflag constant byte address 0x0 - dummy sync flag']
  #allocation22 [shape = 'u32[]', space=smem, size = 0x4, offset = 0x44, fixed_abs, tag = 'smem constant byte address 0x44 - assertion arg 0']
  #allocation23 [shape = 'u32[]', space=smem, size = 0x4, offset = 0x48, fixed_abs, tag = 'smem constant byte address 0x48 - assertion arg 1']
  #allocation24 [shape = 's32[]', space=sflag, size = 0x4, offset = 0, fixed_abs, tag = 'sflag constant byte address 0x0 - dummy sync flag']
  #allocation25 [shape = 's32[]', space=sflag, size = 0x4, offset = 0, fixed_abs, tag = 'sflag constant byte address 0x0 - dummy sync flag']
  %s0 = inlined_call_operand.hbm [shape: f32[32,16], index: 0, kind: input, shape index: {}]
  %s1 = inlined_call_operand.vmem [shape: bf16[48,256], index: 1, kind: input, shape index: {}]
  %s2 = inlined_call_operand.vmem [shape: f32[1,256], index: 2, kind: input, shape index: {}]
  %s3 = inlined_call_operand.vmem [shape: f32[32,2], index: 3, kind: input, shape index: {}]
  %s4 = inlined_call_operand.vmem [shape: bf16[16,32], index: 4, kind: input, shape index: {}]
  %s5 = inlined_call_operand.vmem [shape: bf16[256,128], index: 5, kind: input, shape index: {}]
  %s6 = inlined_call_operand.hbm [shape: bf16[384,256], index: 6, kind: input, shape index: {}]
  %s7 = inlined_call_operand.hbm [shape: f32[1,256], index: 7, kind: input, shape index: {}]
  %s8 = inlined_call_operand.vmem [shape: f32[16,2], index: 8, kind: input, shape index: {}]
  %s9 = inlined_call_operand.vmem [shape: bf16[8,16], index: 9, kind: input, shape index: {}]
  %s10 = inlined_call_operand.hbm [shape: bf16[256,128], index: 10, kind: input, shape index: {}]
  %s11 = inlined_call_operand.hbm [shape: bf16[384,256], index: 11, kind: input, shape index: {}]
  %s12 = inlined_call_operand.hbm [shape: f32[1,256], index: 12, kind: input, shape index: {}]
  %s13 = inlined_call_operand.vmem [shape: f32[8,2], index: 13, kind: input, shape index: {}]
  %s14 = inlined_call_operand.vmem [shape: bf16[4,8], index: 14, kind: input, shape index: {}]
  %s15 = inlined_call_operand.hbm [shape: bf16[256,128], index: 15, kind: input, shape index: {}]
  %s16 = inlined_call_operand.hbm [shape: bf16[384,256], index: 16, kind: input, shape index: {}]
  %s17 = inlined_call_operand.hbm [shape: f32[1,256], index: 17, kind: input, shape index: {}]
  %s18 = inlined_call_operand.vmem [shape: f32[4,2], index: 18, kind: input, shape index: {}]
  %s19 = inlined_call_operand.vmem [shape: bf16[2,4], index: 19, kind: input, shape index: {}]
  %s20 = inlined_call_operand.vmem [shape: f32[128,2], index: 20, kind: input, shape index: {}]
  %s21 = inlined_call_operand.hbm [shape: f32[1,2], index: 21, kind: input, shape index: {}]
  %s22 = inlined_call_operand.hbm [shape: f32[2,2], index: 22, kind: output, shape index: {}]
  %s23 = sld [smem:[#allocation0]]
  $region130: #{baseline_forward.1} parent=0
    _
  %s25 = ssub.s32 1, %s23
  %s26 = scalar_select 0, %s25, %s23
  $region1: #{baseline_forward.1} parent=0
    #allocation5 [shape = 'u8[16384]{0}', space=vmem, size = 0x4000, scoped, tag = 'input window, operand 0, single buffered']
    #allocation6 [shape = 's32[1]{0}', space=sflag, size = 0x4, scoped, tag = 'scoped memory for baseline_forward.1']
    #allocation7 [shape = 's32[1]{0}', space=sflag, size = 0x4, scoped, tag = 'scoped memory for baseline_forward.1']
    #allocation8 [shape = 'u8[196608]{0}', space=vmem, size = 0x30000, scoped, tag = 'input window, operand 6, single buffered']
    #allocation9 [shape = 's32[1]{0}', space=sflag, size = 0x4, scoped, tag = 'scoped memory for baseline_forward.1']
    #allocation10 [shape = 'u8[1024]{0}', space=vmem, size = 0x400, scoped, tag = 'input window, operand 7, single buffered']
    #allocation11 [shape = 'u8[65536]{0}', space=vmem, size = 0x10000, scoped, tag = 'input window, operand 10, single buffered']
    #allocation12 [shape = 's32[1]{0}', space=sflag, size = 0x4, scoped, tag = 'scoped memory for baseline_forward.1']
    #allocation13 [shape = 'u8[1024]{0}', space=vmem, size = 0x400, scoped, tag = 'input window, operand 12, single buffered']
    #allocation14 [shape = 'u8[65536]{0}', space=vmem, size = 0x10000, scoped, tag = 'input window, operand 15, single buffered']
    #allocation15 [shape = 's32[1]{0}', space=sflag, size = 0x4, scoped, tag = 'scoped memory for baseline_forward.1']
    #allocation16 [shape = 'u8[1024]{0}', space=vmem, size = 0x400, scoped, tag = 'input window, operand 17, single buffered']
    #allocation17 [shape = 'u8[512]{0}', space=vmem, size = 0x400, scoped, tag = 'input window, operand 21, single buffered']
    #allocation18 [shape = 's32[1]{0}', space=sflag, size = 0x4, scoped, tag = 'scoped memory for baseline_forward.1']
    #allocation19 [shape = 'u8[1024]{0}', space=vmem, size = 0x400, scoped, tag = 'output window, operand 0, single buffered']
    %27 = vsyncpa [#allocation6], 0
    %28 = vsyncpa [#allocation9], 0
    %29 = vsyncpa [#allocation12], 0
    %30 = vsyncpa [#allocation15], 0
    %31 = vsyncpa [#allocation18], 0
    %32 = vsyncpa [#allocation7], 0
    // Predicated region
    $region2: #{baseline_forward.1} parent=1 // pred_check
      _
    $region3: #{baseline_forward.1} parent=1 // pred_check_branch
      %34 = sbr.rel (0) target = $region5
    $region4: #{baseline_forward.1} parent=1 // pred_region
      %36 = vsyncadd [#allocation6], 0
      %s37 = sshll.u32 %s0, 4
      %s38 = int_to_ptr.hbm [resolvable:$true] %s37
      %s39 = sshll.u32 [#allocation5], 4
      %s40 = int_to_ptr.vmem [resolvable:$true] %s39
      %45 = dma.hbm_to_vmem [thread:$0]  %s38, 512, %s40, [#allocation6], 128, 128, 8
    $region5: #{baseline_forward.1} parent=1 // pred_fallthru
      _
    // Predicated region
    $region6: #{baseline_forward.1} parent=1 // pred_check
      _
    $region7: #{baseline_forward.1} parent=1 // pred_check_branch
      %47 = sbr.rel (0) target = $region9
    $region8: #{baseline_forward.1} parent=1 // pred_region
      _
    $region9: #{baseline_forward.1} parent=1 // pred_fallthru
      _
    // Predicated region
    $region10: #{baseline_forward.1} parent=1 // pred_check
      _
    $region11: #{baseline_forward.1} parent=1 // pred_check_branch
      %49 = sbr.rel (0) target = $region13
    $region12: #{baseline_forward.1} parent=1 // pred_region
      _
    $region13: #{baseline_forward.1} parent=1 // pred_fallthru
      _
    // Predicated region
    $region14: #{baseline_forward.1} parent=1 // pred_check
      _
    $region15: #{baseline_forward.1} parent=1 // pred_check_branch
      %51 = sbr.rel (0) target = $region17
    $region16: #{baseline_forward.1} parent=1 // pred_region
      _
    $region17: #{baseline_forward.1} parent=1 // pred_fallthru
      _
    // Predicated region
    $region18: #{baseline_forward.1} parent=1 // pred_check
      _
    $region19: #{baseline_forward.1} parent=1 // pred_check_branch
      %53 = sbr.rel (0) target = $region21
    $region20: #{baseline_forward.1} parent=1 // pred_region
      _
    $region21: #{baseline_forward.1} parent=1 // pred_fallthru
      _
    // Predicated region
    $region22: #{baseline_forward.1} parent=1 // pred_check
      _
    $region23: #{baseline_forward.1} parent=1 // pred_check_branch
      %55 = sbr.rel (0) target = $region25
    $region24: #{baseline_forward.1} parent=1 // pred_region
      _
    $region25: #{baseline_forward.1} parent=1 // pred_fallthru
      _
    // Predicated region
    $region26: #{baseline_forward.1} parent=1 // pred_check
      _
    $region27: #{baseline_forward.1} parent=1 // pred_check_branch
      %57 = sbr.rel (0) target = $region29
    $region28: #{baseline_forward.1} parent=1 // pred_region
      %59 = vsyncadd [#allocation9], 0
      %s60 = sshll.u32 %s6, 4
      %s61 = int_to_ptr.hbm [resolvable:$true] %s60
      %s62 = sshll.u32 [#allocation8], 4
      %s63 = int_to_ptr.vmem [resolvable:$true] %s62
      %68 = dma.hbm_to_vmem [thread:$0]  %s61, 6144, %s63, [#allocation9], 128, 128, 8
    $region29: #{baseline_forward.1} parent=1 // pred_fallthru
      _
    // Predicated region
    $region30: #{baseline_forward.1} parent=1 // pred_check
      _
    $region31: #{baseline_forward.1} parent=1 // pred_check_branch
      %70 = sbr.rel (0) target = $region33
    $region32: #{baseline_forward.1} parent=1 // pred_region
      %72 = vsyncadd [#allocation9], 0
      %s74 = sshll.u32 %s7, 4
      %s75 = int_to_ptr.hbm [resolvable:$true] %s74
      %s76 = sshll.u32 [#allocation10], 4
      %s77 = int_to_ptr.vmem [resolvable:$true] %s76
      %79 = dma.hbm_to_vmem [thread:$0]  %s75, 32, %s77, [#allocation9]
    $region33: #{baseline_forward.1} parent=1 // pred_fallthru
      _
    // Predicated region
    $region34: #{baseline_forward.1} parent=1 // pred_check
      _
    $region35: #{baseline_forward.1} parent=1 // pred_check_branch
      %81 = sbr.rel (0) target = $region37
    $region36: #{baseline_forward.1} parent=1 // pred_region
      _
    $region37: #{baseline_forward.1} parent=1 // pred_fallthru
      _
    // Predicated region
    $region38: #{baseline_forward.1} parent=1 // pred_check
      _
    $region39: #{baseline_forward.1} parent=1 // pred_check_branch
      %83 = sbr.rel (0) target = $region41
    $region40: #{baseline_forward.1} parent=1 // pred_region
      _
    $region41: #{baseline_forward.1} parent=1 // pred_fallthru
      _
    // Predicated region
    $region42: #{baseline_forward.1} parent=1 // pred_check
      _
    $region43: #{baseline_forward.1} parent=1 // pred_check_branch
      %85 = sbr.rel (0) target = $region45
    $region44: #{baseline_forward.1} parent=1 // pred_region
      %87 = vsyncadd [#allocation12], 0
      %s88 = sshll.u32 %s10, 4
      %s89 = int_to_ptr.hbm [resolvable:$true] %s88
      %s90 = sshll.u32 [#allocation11], 4
      %s91 = int_to_ptr.vmem [resolvable:$true] %s90
      %96 = dma.hbm_to_vmem [thread:$0]  %s89, 2048, %s91, [#allocation12], 64, 64, 4
    $region45: #{baseline_forward.1} parent=1 // pred_fallthru
      _
    // Predicated region
    $region46: #{baseline_forward.1} parent=1 // pred_check
      _
    $region47: #{baseline_forward.1} parent=1 // pred_check_branch
      %98 = sbr.rel (0) target = $region49
    $region48: #{baseline_forward.1} parent=1 // pred_region
      %100 = vsyncadd [#allocation12], 0
      %s102 = sshll.u32 %s12, 4
      %s103 = int_to_ptr.hbm [resolvable:$true] %s102
      %s104 = sshll.u32 [#allocation13], 4
      %s105 = int_to_ptr.vmem [resolvable:$true] %s104
      %107 = dma.hbm_to_vmem [thread:$0]  %s103, 32, %s105, [#allocation12]
    $region49: #{baseline_forward.1} parent=1 // pred_fallthru
      _
    // Predicated region
    $region50: #{baseline_forward.1} parent=1 // pred_check
      _
    $region51: #{baseline_forward.1} parent=1 // pred_check_branch
      %109 = sbr.rel (0) target = $region53
    $region52: #{baseline_forward.1} parent=1 // pred_region
      _
    $region53: #{baseline_forward.1} parent=1 // pred_fallthru
      _
    // Predicated region
    $region54: #{baseline_forward.1} parent=1 // pred_check
      _
    $region55: #{baseline_forward.1} parent=1 // pred_check_branch
      %111 = sbr.rel (0) target = $region57
    $region56: #{baseline_forward.1} parent=1 // pred_region
      _
    $region57: #{baseline_forward.1} parent=1 // pred_fallthru
      _
    // Predicated region
    $region58: #{baseline_forward.1} parent=1 // pred_check
      _
    $region59: #{baseline_forward.1} parent=1 // pred_check_branch
      %113 = sbr.rel (0) target = $region61
    $region60: #{baseline_forward.1} parent=1 // pred_region
      %115 = vsyncadd [#allocation15], 0
      %s116 = sshll.u32 %s15, 4
      %s117 = int_to_ptr.hbm [resolvable:$true] %s116
      %s118 = sshll.u32 [#allocation14], 4
      %s119 = int_to_ptr.vmem [resolvable:$true] %s118
      %124 = dma.hbm_to_vmem [thread:$0]  %s117, 2048, %s119, [#allocation15], 64, 64, 4
    $region61: #{baseline_forward.1} parent=1 // pred_fallthru
      _
    // Predicated region
    $region62: #{baseline_forward.1} parent=1 // pred_check
      _
    $region63: #{baseline_forward.1} parent=1 // pred_check_branch
      %126 = sbr.rel (0) target = $region65
    $region64: #{baseline_forward.1} parent=1 // pred_region
      %128 = vsyncadd [#allocation15], 0
      %s130 = sshll.u32 %s17, 4
      %s131 = int_to_ptr.hbm [resolvable:$true] %s130
      %s132 = sshll.u32 [#allocation16], 4
      %s133 = int_to_ptr.vmem [resolvable:$true] %s132
      %135 = dma.hbm_to_vmem [thread:$0]  %s131, 32, %s133, [#allocation15]
    $region65: #{baseline_forward.1} parent=1 // pred_fallthru
      _
    // Predicated region
    $region66: #{baseline_forward.1} parent=1 // pred_check
      _
    $region67: #{baseline_forward.1} parent=1 // pred_check_branch
      %137 = sbr.rel (0) target = $region69
    $region68: #{baseline_forward.1} parent=1 // pred_region
      _
    $region69: #{baseline_forward.1} parent=1 // pred_fallthru
      _
    // Predicated region
    $region70: #{baseline_forward.1} parent=1 // pred_check
      _
    $region71: #{baseline_forward.1} parent=1 // pred_check_branch
      %139 = sbr.rel (0) target = $region73
    $region72: #{baseline_forward.1} parent=1 // pred_region
      _
    $region73: #{baseline_forward.1} parent=1 // pred_fallthru
      _
    // Predicated region
    $region74: #{baseline_forward.1} parent=1 // pred_check
      _
    $region75: #{baseline_forward.1} parent=1 // pred_check_branch
      %141 = sbr.rel (0) target = $region77
    $region76: #{baseline_forward.1} parent=1 // pred_region
      _
    $region77: #{baseline_forward.1} parent=1 // pred_fallthru
      _
    // Predicated region
    $region78: #{baseline_forward.1} parent=1 // pred_check
      _
    $region79: #{baseline_forward.1} parent=1 // pred_check_branch
      %143 = sbr.rel (0) target = $region81
    $region80: #{baseline_forward.1} parent=1 // pred_region
      %145 = vsyncadd [#allocation18], 0
      %s147 = sshll.u32 %s21, 4
      %s148 = int_to_ptr.hbm [resolvable:$true] %s147
      %s149 = sshll.u32 [#allocation17], 4
      %s150 = int_to_ptr.vmem [resolvable:$true] %s149
      %152 = dma.hbm_to_vmem [thread:$0]  %s148, 16, %s150, [#allocation18]
    $region81: #{baseline_forward.1} parent=1 // pred_fallthru
      _
    // Predicated region
    $region82: #{baseline_forward.1} parent=1 // pred_check
      _
    $region83: #{baseline_forward.1} parent=1 // pred_check_branch
      %154 = sbr.rel (0) target = $region85
    $region84: #{baseline_forward.1} parent=1 // pred_region
      %156 = dma.done [#allocation6], 512
    $region85: #{baseline_forward.1} parent=1 // pred_fallthru
      _
    // Predicated region
    $region86: #{baseline_forward.1} parent=1 // pred_check
      _
    $region87: #{baseline_forward.1} parent=1 // pred_check_branch
      %158 = sbr.rel (0) target = $region89
    $region88: #{baseline_forward.1} parent=1 // pred_region
      %160 = dma.done [#allocation9], 6144
    $region89: #{baseline_forward.1} parent=1 // pred_fallthru
      _
    // Predicated region
    $region90: #{baseline_forward.1} parent=1 // pred_check
      _
    $region91: #{baseline_forward.1} parent=1 // pred_check_branch
      %162 = sbr.rel (0) target = $region93
    $region92: #{baseline_forward.1} parent=1 // pred_region
      %164 = dma.done [#allocation9], 32
    $region93: #{baseline_forward.1} parent=1 // pred_fallthru
      _
    // Predicated region
    $region94: #{baseline_forward.1} parent=1 // pred_check
      _
    $region95: #{baseline_forward.1} parent=1 // pred_check_branch
      %166 = sbr.rel (0) target = $region97
    $region96: #{baseline_forward.1} parent=1 // pred_region
      %168 = dma.done [#allocation12], 2048
    $region97: #{baseline_forward.1} parent=1 // pred_fallthru
      _
    // Predicated region
    $region98: #{baseline_forward.1} parent=1 // pred_check
      _
    $region99: #{baseline_forward.1} parent=1 // pred_check_branch
      %170 = sbr.rel (0) target = $region101
    $region100: #{baseline_forward.1} parent=1 // pred_region
      %172 = dma.done [#allocation12], 32
    $region101: #{baseline_forward.1} parent=1 // pred_fallthru
      _
    // Predicated region
    $region102: #{baseline_forward.1} parent=1 // pred_check
      _
    $region103: #{baseline_forward.1} parent=1 // pred_check_branch
      %174 = sbr.rel (0) target = $region105
    $region104: #{baseline_forward.1} parent=1 // pred_region
      %176 = dma.done [#allocation15], 2048
    $region105: #{baseline_forward.1} parent=1 // pred_fallthru
      _
    // Predicated region
    $region106: #{baseline_forward.1} parent=1 // pred_check
      _
    $region107: #{baseline_forward.1} parent=1 // pred_check_branch
      %178 = sbr.rel (0) target = $region109
    $region108: #{baseline_forward.1} parent=1 // pred_region
      %180 = dma.done [#allocation15], 32
    $region109: #{baseline_forward.1} parent=1 // pred_fallthru
      _
    // Predicated region
    $region110: #{baseline_forward.1} parent=1 // pred_check
      _
    $region111: #{baseline_forward.1} parent=1 // pred_check_branch
      %182 = sbr.rel (0) target = $region113
    $region112: #{baseline_forward.1} parent=1 // pred_region
      %184 = dma.done [#allocation18], 16
    $region113: #{baseline_forward.1} parent=1 // pred_fallthru
      _
    // Predicated region
    $region114: #{baseline_forward.1} parent=1 // pred_check
      _
    $region115: #{baseline_forward.1} parent=1 // pred_check_branch
      %187 = sbr.rel target = $region117
    $region116: #{baseline_forward.1} parent=1 // pred_region
      %188 = sst [smem:[#allocation22]] [#allocation21]
      %189 = sst [smem:[#allocation23]] [#allocation20]
    $region117: #{baseline_forward.1} parent=1 // pred_fallthru
      _
    %191 = shalt.err (0)
    %s193 = sshll.u32 %s11, 4
    %s194 = int_to_ptr.hbm [resolvable:$true] %s193
    %s195 = sshll.u32 [#allocation2], 4
    %s196 = int_to_ptr.vmem [resolvable:$true] %s195
    %198 = dma.hbm_to_vmem [thread:$0]  %s194, 6144, %s196, [#allocation4]
    %s199 = scalar_lea.sflag [#allocation4], 1
    // Predicated region
    $region118: #{baseline_forward.1} parent=1 // pred_check
      _
    $region119: #{baseline_forward.1} parent=1 // pred_check_branch
      %201 = sbr.rel target = $region121
    $region120: #{baseline_forward.1} parent=1 // pred_region
      %202 = sst [smem:[#allocation22]] [#allocation25]
      %203 = sst [smem:[#allocation23]] [#allocation24]
    $region121: #{baseline_forward.1} parent=1 // pred_fallthru
      _
    %205 = shalt.err (0)
    %s207 = sshll.u32 %s16, 4
    %s208 = int_to_ptr.hbm [resolvable:$true] %s207
    %s209 = sshll.u32 [#allocation3], 4
    %s210 = int_to_ptr.vmem [resolvable:$true] %s209
    %212 = dma.hbm_to_vmem [thread:$0]  %s208, 6144, %s210, %s199
    %v213 = vld [vmem:[#allocation5] sm:$0xff]
    %v214 = vld [vmem:[#allocation5 + $0x8] sm:$0xff]
    %v215 = vld [vmem:[#allocation5 + $0x10] sm:$0xff]
    %v216 = vld [vmem:[#allocation5 + $0x18] sm:$0xff]
    %v217 = vrot.slane %v213, 7
    %v218 = vrot.slane %v214, 7
    %v219 = vrot.slane %v215, 7
    %v220 = vrot.slane %v216, 7
    %v221 = vlaneseq
    %v222 = vshrl.u32 %v221, 7
    %vm223 = vcmp.lt.s32.totalorder %v222, 1
    %v224 = vsel %vm223, %v219, %v220
    %v225 = vsel %vm223, %v218, %v219
    %v226 = vsel %vm223, %v217, %v218
    %v227 = vsel %vm223, %v220, %v217
    %v228 = vld [vmem:[%s3] sm:$0xff]
    %v229 = vld [vmem:[%s3 + $0x8] sm:$0xff]
    %v230 = vld [vmem:[%s3 + $0x10] sm:$0xff]
    %v231 = vld [vmem:[%s3 + $0x18] sm:$0xff]
    %233 = vset.pattern.permute.xlu0 0
    %234 = vperm.xlu0 %233, %v228
    %v235 = vpop.permute.xlu0 %234
    %238 = vset.pattern.permute.xlu0 0
    %239 = vperm.xlu0 %238, %v229
    %v240 = vpop.permute.xlu0 %239
    %243 = vset.pattern.permute.xlu0 0
    %244 = vperm.xlu0 %243, %v230
    %v245 = vpop.permute.xlu0 %244
    %248 = vset.pattern.permute.xlu0 0
    %249 = vperm.xlu0 %248, %v231
    %v250 = vpop.permute.xlu0 %249
    %v252 = vmul.f32 %v227, %v235
    %v253 = vmul.f32 %v226, %v240
    %v254 = vmul.f32 %v225, %v245
    %v255 = vmul.f32 %v224, %v250
    %v256 = vrot.slane %v213, 1
    %v257 = vrot.slane %v214, 1
    %v258 = vrot.slane %v215, 1
    %v259 = vrot.slane %v216, 1
    %vm260 = vcmp.lt.s32.totalorder %v222, 7
    %v261 = vsel %vm260, %v258, %v259
    %v262 = vsel %vm260, %v257, %v258
    %v263 = vsel %vm260, %v256, %v257
    %v264 = vsel %vm260, %v259, %v256
    %265 = vset.pattern.permute.xlu0 1
    %266 = vperm.xlu0 %265, %v228
    %v267 = vpop.permute.xlu0 %266
    %269 = vset.pattern.permute.xlu0 1
    %270 = vperm.xlu0 %269, %v229
    %v271 = vpop.permute.xlu0 %270
    %273 = vset.pattern.permute.xlu0 1
    %274 = vperm.xlu0 %273, %v230
    %v275 = vpop.permute.xlu0 %274
    %277 = vset.pattern.permute.xlu0 1
    %278 = vperm.xlu0 %277, %v231
    %v279 = vpop.permute.xlu0 %278
    %v281 = vmul.f32 %v263, %v267
    %v282 = vmul.f32 %v262, %v271
    %v283 = vmul.f32 %v261, %v275
    %v284 = vmul.f32 %v264, %v279
    %289 = vrot.lane.b32.xlu0 %v213, 16
    %v290 = vpop.permute.xlu0 %289
    %291 = vrot.lane.b32.xlu0 %v214, 16
    %v292 = vpop.permute.xlu0 %291
    %293 = vrot.lane.b32.xlu0 %v215, 16
    %v294 = vpop.permute.xlu0 %293
    %295 = vrot.lane.b32.xlu0 %v216, 16
    %v296 = vpop.permute.xlu0 %295
    %305 = vrot.lane.b32.xlu0 %v281, 32
    %v306 = vpop.permute.xlu0 %305
    %307 = vrot.lane.b32.xlu0 %v282, 32
    %v308 = vpop.permute.xlu0 %307
    %309 = vrot.lane.b32.xlu0 %v283, 32
    %v310 = vpop.permute.xlu0 %309
    %311 = vrot.lane.b32.xlu0 %v284, 32
    %v312 = vpop.permute.xlu0 %311
    %vm317 = vcmask 130048
    %v318 = vsel %vm317, %v252, %v290
    %v319 = vsel %vm317, %v253, %v292
    %v320 = vsel %vm317, %v254, %v294
    %v321 = vsel %vm317, %v255, %v296
    %vm322 = vcmask 261120
    %v323 = vsel %vm322, %v318, %v306
    %v324 = vsel %vm322, %v319, %v308
    %v325 = vsel %vm322, %v320, %v310
    %v326 = vsel %vm322, %v321, %v312
    %v327 = vpack.c.bf16 %v324, %v323
    %v328 = vpack.c.bf16 %v326, %v325
    %v329 = vld [vmem:[%s1] sm:$0xff]
    %v330 = vld [vmem:[%s1 + $0x8] sm:$0xff]
    %v331 = vld [vmem:[%s1 + $0x10] sm:$0xff]
    %v332 = vld [vmem:[%s1 + $0x18] sm:$0xff]
    %v333 = vld [vmem:[%s1 + $0x20] sm:$0xff]
    %v334 = vld [vmem:[%s1 + $0x28] sm:$0xff]
    %v335 = vld [vmem:[%s2] sm:$0x3]
    %v337 = vperm.slane %v335, 0
    %v338 = vperm.slane %v335, 1
    %v347 = vunpack.c.l.b16 %v329
    %v348 = vunpack.c.h.b16 %v329
    %v349 = vunpack.c.l.b16 %v330
    %v350 = vunpack.c.h.b16 %v330
    %v351 = vunpack.c.l.b16 %v331
    %v352 = vunpack.c.h.b16 %v331
    %v353 = vunpack.c.l.b16 %v332
    %v354 = vunpack.c.h.b16 %v332
    %v355 = vunpack.c.l.b16 %v333
    %v356 = vunpack.c.h.b16 %v333
    %v357 = vunpack.c.l.b16 %v334
    %v358 = vunpack.c.h.b16 %v334
    %v359 = vpack.c.b16 %v349, %v347
    %v360 = vpack.c.b16 %v350, %v348
    %v361 = vpack.c.b16 %v353, %v351
    %v362 = vpack.c.b16 %v354, %v352
    %v363 = vpack.c.b16 %v357, %v355
    %v364 = vpack.c.b16 %v358, %v356
    %vm371 = vcmask 392192
    %v373 = vsel %vm371, %v327, 0
    %v376 = vsel %vm371, %v328, 0
    %378 = vmatpush.bf16.msra.mxu0 0
    %379 = vmatpush.bf16.msra.mxu0 0
    %380 = vmatpush.bf16.msra.mxu0 0
    %381 = vmatpush.bf16.msra.mxu0 0
    %382 = vmatpush.bf16.msra.mxu0 0
    %383 = vmatpush.bf16.msra.mxu0 %v363
    %384 = vmatpush.bf16.msra.mxu0 %v361
    %385 = vmatpush.bf16.msra.mxu0 %v359
    %386 = vmatmul.bf16.gmra.mxu0 %v373
    %v387 = vpop.f32.mrf.mxu0
    %v388 = vadd.f32 %v337, %v387
    %v389 = vpop.f32.mrf.mxu0
    %v390 = vadd.f32 %v337, %v389
    %391 = vmatmul.bf16.gmra.mxu0 %v376
    %v392 = vpop.f32.mrf.mxu0
    %v393 = vadd.f32 %v337, %v392
    %v394 = vpop.f32.mrf.mxu0
    %v395 = vadd.f32 %v337, %v394
    %396 = vdwg.mxu0
    %397 = vmatpush.bf16.msra.mxu0 0
    %398 = vmatpush.bf16.msra.mxu0 0
    %399 = vmatpush.bf16.msra.mxu0 0
    %400 = vmatpush.bf16.msra.mxu0 0
    %401 = vmatpush.bf16.msra.mxu0 0
    %402 = vmatpush.bf16.msra.mxu0 %v364
    %403 = vmatpush.bf16.msra.mxu0 %v362
    %404 = vmatpush.bf16.msra.mxu0 %v360
    %405 = vmatmul.bf16.gmra.mxu0 %v373
    %v406 = vpop.f32.mrf.mxu0
    %v407 = vadd.f32 %v338, %v406
    %v408 = vpop.f32.mrf.mxu0
    %v409 = vadd.f32 %v338, %v408
    %410 = vmatmul.bf16.gmra.mxu0 %v376
    %v411 = vpop.f32.mrf.mxu0
    %v412 = vadd.f32 %v338, %v411
    %v413 = vpop.f32.mrf.mxu0
    %v414 = vadd.f32 %v338, %v413
    %415 = vdwg.mxu0
    %v416 = vmax.f32 %v388, 0.0
    %v417 = vmax.f32 %v407, 0.0
    %v418 = vmax.f32 %v390, 0.0
    %v419 = vmax.f32 %v409, 0.0
    %v420 = vmax.f32 %v393, 0.0
    %v421 = vmax.f32 %v412, 0.0
    %v422 = vmax.f32 %v395, 0.0
    %v423 = vmax.f32 %v414, 0.0
    %v424 = vrot.slane %v416, 1
    %v425 = vrot.slane %v417, 1
    %v426 = vrot.slane %v418, 1
    %v427 = vrot.slane %v419, 1
    %v428 = vrot.slane %v420, 1
    %v429 = vrot.slane %v421, 1
    %v430 = vrot.slane %v422, 1
    %v431 = vrot.slane %v423, 1
    %v432 = vsel %vm260, %v428, %v430
    %v433 = vsel %vm260, %v429, %v431
    %v434 = vsel %vm260, %v426, %v428
    %v435 = vsel %vm260, %v427, %v429
    %v436 = vsel %vm260, %v424, %v426
    %v437 = vsel %vm260, %v425, %v427
    %v438 = vsel %vm260, %v430, %v424
    %v439 = vsel %vm260, %v431, %v425
    %v440 = vmax.f32 %v416, %v436
    %v441 = vmax.f32 %v417, %v437
    %v442 = vmax.f32 %v418, %v434
    %v443 = vmax.f32 %v419, %v435
    %v444 = vmax.f32 %v420, %v432
    %v445 = vmax.f32 %v421, %v433
    %v446 = vmax.f32 %v422, %v438
    %v447 = vmax.f32 %v423, %v439
    %v448 = vld [vmem:[%s4] sm:$0xf]
    %v449 = vld [vmem:[%s4 + $0x4] sm:$0xf]
    %v450 = vpack.c.bf16 %v442, %v440
    %v451 = vpack.c.bf16 %v443, %v441
    %v452 = vpack.c.bf16 %v446, %v444
    %v453 = vpack.c.bf16 %v447, %v445
    %v456 = vunpack.c.l.b16 %v448
    %v457 = vunpack.c.l.b16 %v449
    %v458 = vpack.c.b16 %v457, %v456
    %v460 = vsel %vm322, %v458, 0
    %462 = vmatpush.bf16.msra.mxu0 0
    %463 = vmatpush.bf16.msra.mxu0 0
    %464 = vmatpush.bf16.msra.mxu0 0
    %465 = vmatpush.bf16.msra.mxu0 0
    %466 = vmatpush.bf16.msra.mxu0 0
    %467 = vmatpush.bf16.msra.mxu0 0
    %468 = vmatpush.bf16.msra.mxu0 %v452
    %469 = vmatpush.bf16.msra.mxu0 %v450
    %470 = vmatmul.bf16.gmra.mxu0 %v460
    %v471 = vpop.f32.mrf.mxu0
    %v472 = vadd.f32 0.0, %v471
    %v473 = vpop.f32.mrf.mxu0
    %v474 = vadd.f32 0.0, %v473
    %475 = vdwg.mxu0
    %476 = vmatpush.bf16.msra.mxu0 0
    %477 = vmatpush.bf16.msra.mxu0 0
    %478 = vmatpush.bf16.msra.mxu0 0
    %479 = vmatpush.bf16.msra.mxu0 0
    %480 = vmatpush.bf16.msra.mxu0 0
    %481 = vmatpush.bf16.msra.mxu0 0
    %482 = vmatpush.bf16.msra.mxu0 %v453
    %483 = vmatpush.bf16.msra.mxu0 %v451
    %484 = vmatmul.bf16.gmra.mxu0 %v460
    %v485 = vpop.f32.mrf.mxu0
    %v486 = vadd.f32 0.0, %v485
    %v487 = vpop.f32.mrf.mxu0
    %v488 = vadd.f32 0.0, %v487
    %489 = vdwg.mxu0
    %490 = vrot.lane.b32.xlu0 %v472, 112
    %v491 = vpop.permute.xlu0 %490
    %492 = vrot.lane.b32.xlu0 %v474, 112
    %v493 = vpop.permute.xlu0 %492
    %494 = vrot.lane.b32.xlu0 %v486, 112
    %v495 = vpop.permute.xlu0 %494
    %496 = vrot.lane.b32.xlu0 %v488, 112
    %v497 = vpop.permute.xlu0 %496
    %v498 = vlaneseq
    %v499 = vand.u32 %v498, 127
    %vm500 = vcmp.lt.s32.totalorder %v499, 112
    %v501 = vsel %vm500, %v491, %v495
    %v502 = vsel %vm500, %v493, %v497
    %v503 = vsel %vm500, %v495, %v491
    %v504 = vsel %vm500, %v497, %v493
    %v505 = vmax.f32 %v472, %v501
    %v506 = vmax.f32 %v486, %v503
    %v507 = vmax.f32 %v474, %v502
    %v508 = vmax.f32 %v488, %v504
    %v509 = vpack.c.bf16 %v507, %v505
    %v510 = vpack.c.bf16 %v508, %v506
    %v511 = vld [vmem:[%s5] sm:$0xf]
    %v512 = vld [vmem:[%s5 + $0x4] sm:$0xf]
    %v513 = vld [vmem:[%s5 + $0x8] sm:$0xf]
    %v514 = vld [vmem:[%s5 + $0xc] sm:$0xf]
    %v515 = vld [vmem:[%s5 + $0x10] sm:$0xf]
    %v516 = vld [vmem:[%s5 + $0x14] sm:$0xf]
    %v517 = vld [vmem:[%s5 + $0x18] sm:$0xf]
    %v518 = vld [vmem:[%s5 + $0x1c] sm:$0xf]
    %v519 = vld [vmem:[%s5 + $0x20] sm:$0xf]
    %v520 = vld [vmem:[%s5 + $0x24] sm:$0xf]
    %v521 = vld [vmem:[%s5 + $0x28] sm:$0xf]
    %v522 = vld [vmem:[%s5 + $0x2c] sm:$0xf]
    %v523 = vld [vmem:[%s5 + $0x30] sm:$0xf]
    %v524 = vld [vmem:[%s5 + $0x34] sm:$0xf]
    %v525 = vld [vmem:[%s5 + $0x38] sm:$0xf]
    %v526 = vld [vmem:[%s5 + $0x3c] sm:$0xf]
    %v527 = vld [vmem:[%s5 + $0x40] sm:$0xf]
    %v528 = vld [vmem:[%s5 + $0x44] sm:$0xf]
    %v529 = vld [vmem:[%s5 + $0x48] sm:$0xf]
    %v530 = vld [vmem:[%s5 + $0x4c] sm:$0xf]
    %v531 = vld [vmem:[%s5 + $0x50] sm:$0xf]
    %v532 = vld [vmem:[%s5 + $0x54] sm:$0xf]
    %v533 = vld [vmem:[%s5 + $0x58] sm:$0xf]
    %v534 = vld [vmem:[%s5 + $0x5c] sm:$0xf]
    %v535 = vld [vmem:[%s5 + $0x60] sm:$0xf]
    %v536 = vld [vmem:[%s5 + $0x64] sm:$0xf]
    %v537 = vld [vmem:[%s5 + $0x68] sm:$0xf]
    %v538 = vld [vmem:[%s5 + $0x6c] sm:$0xf]
    %v539 = vld [vmem:[%s5 + $0x70] sm:$0xf]
    %v540 = vld [vmem:[%s5 + $0x74] sm:$0xf]
    %v541 = vld [vmem:[%s5 + $0x78] sm:$0xf]
    %v542 = vld [vmem:[%s5 + $0x7c] sm:$0xf]
    %v575 = vunpack.c.l.b16 %v511
    %v576 = vunpack.c.l.b16 %v512
    %v577 = vunpack.c.l.b16 %v513
    %v578 = vunpack.c.l.b16 %v514
    %v579 = vunpack.c.l.b16 %v515
    %v580 = vunpack.c.l.b16 %v516
    %v581 = vunpack.c.l.b16 %v517
    %v582 = vunpack.c.l.b16 %v518
    %v583 = vunpack.c.l.b16 %v519
    %v584 = vunpack.c.l.b16 %v520
    %v585 = vunpack.c.l.b16 %v521
    %v586 = vunpack.c.l.b16 %v522
    %v587 = vunpack.c.l.b16 %v523
    %v588 = vunpack.c.l.b16 %v524
    %v589 = vunpack.c.l.b16 %v525
    %v590 = vunpack.c.l.b16 %v526
    %v591 = vunpack.c.l.b16 %v527
    %v592 = vunpack.c.l.b16 %v528
    %v593 = vunpack.c.l.b16 %v529
    %v594 = vunpack.c.l.b16 %v530
    %v595 = vunpack.c.l.b16 %v531
    %v596 = vunpack.c.l.b16 %v532
    %v597 = vunpack.c.l.b16 %v533
    %v598 = vunpack.c.l.b16 %v534
    %v599 = vunpack.c.l.b16 %v535
    %v600 = vunpack.c.l.b16 %v536
    %v601 = vunpack.c.l.b16 %v537
    %v602 = vunpack.c.l.b16 %v538
    %v603 = vunpack.c.l.b16 %v539
    %v604 = vunpack.c.l.b16 %v540
    %v605 = vunpack.c.l.b16 %v541
    %v606 = vunpack.c.l.b16 %v542
    %v607 = vpack.c.b16 %v576, %v575
    %v608 = vpack.c.b16 %v578, %v577
    %v609 = vpack.c.b16 %v580, %v579
    %v610 = vpack.c.b16 %v582, %v581
    %v611 = vpack.c.b16 %v584, %v583
    %v612 = vpack.c.b16 %v586, %v585
    %v613 = vpack.c.b16 %v588, %v587
    %v614 = vpack.c.b16 %v590, %v589
    %v615 = vpack.c.b16 %v592, %v591
    %v616 = vpack.c.b16 %v594, %v593
    %v617 = vpack.c.b16 %v596, %v595
    %v618 = vpack.c.b16 %v598, %v597
    %v619 = vpack.c.b16 %v600, %v599
    %v620 = vpack.c.b16 %v602, %v601
    %v621 = vpack.c.b16 %v604, %v603
    %v622 = vpack.c.b16 %v606, %v605
    %639 = vmatpush.bf16.msra.mxu0 %v614
    %640 = vmatpush.bf16.msra.mxu0 %v613
    %641 = vmatpush.bf16.msra.mxu0 %v612
    %642 = vmatpush.bf16.msra.mxu0 %v611
    %643 = vmatpush.bf16.msra.mxu0 %v610
    %644 = vmatpush.bf16.msra.mxu0 %v609
    %645 = vmatpush.bf16.msra.mxu0 %v608
    %646 = vmatpush.bf16.msra.mxu0 %v607
    %647 = vmatmul.bf16.gmra.mxu0 %v509
    %v648 = vpop.f32.mrf.mxu0
    %v649 = vadd.f32 0.0, %v648
    %v650 = vpop.f32.mrf.mxu0
    %v651 = vadd.f32 0.0, %v650
    %652 = vdwg.mxu0
    %653 = vmatpush.bf16.msra.mxu0 %v622
    %654 = vmatpush.bf16.msra.mxu0 %v621
    %655 = vmatpush.bf16.msra.mxu0 %v620
    %656 = vmatpush.bf16.msra.mxu0 %v619
    %657 = vmatpush.bf16.msra.mxu0 %v618
    %658 = vmatpush.bf16.msra.mxu0 %v617
    %659 = vmatpush.bf16.msra.mxu0 %v616
    %660 = vmatpush.bf16.msra.mxu0 %v615
    %661 = vmatmul.bf16.gmra.mxu0 %v510
    %v662 = vpop.f32.mrf.mxu0
    %v663 = vadd.f32 %v649, %v662
    %v664 = vpop.f32.mrf.mxu0
    %v665 = vadd.f32 %v651, %v664
    %666 = vdwg.mxu0
    %v667 = vrot.slane %v663, 7
    %v668 = vrot.slane %v665, 7
    %v669 = vsel %vm223, %v667, %v668
    %v670 = vsel %vm223, %v668, %v667
    %v671 = vld [vmem:[%s8] sm:$0xff]
    %v672 = vld [vmem:[%s8 + $0x8] sm:$0xff]
    %674 = vset.pattern.permute.xlu0 0
    %675 = vperm.xlu0 %674, %v671
    %v676 = vpop.permute.xlu0 %675
    %679 = vset.pattern.permute.xlu0 0
    %680 = vperm.xlu0 %679, %v672
    %v681 = vpop.permute.xlu0 %680
    %v683 = vmul.f32 %v670, %v676
    %v684 = vmul.f32 %v669, %v681
    %v685 = vrot.slane %v663, 1
    %v686 = vrot.slane %v665, 1
    %v687 = vsel %vm260, %v685, %v686
    %v688 = vsel %vm260, %v686, %v685
    %689 = vset.pattern.permute.xlu0 1
    %690 = vperm.xlu0 %689, %v671
    %v691 = vpop.permute.xlu0 %690
    %693 = vset.pattern.permute.xlu0 1
    %694 = vperm.xlu0 %693, %v672
    %v695 = vpop.permute.xlu0 %694
    %v697 = vmul.f32 %v687, %v691
    %v698 = vmul.f32 %v688, %v695
    %v699 = vpack.c.bf16 %v684, %v683
    %v700 = vpack.c.bf16 %v665, %v663
    %v701 = vpack.c.bf16 %v698, %v697
    %v702 = vld [vmem:[#allocation8] sm:$0xff]
    %v703 = vld [vmem:[#allocation8 + $0x8] sm:$0xff]
    %v704 = vld [vmem:[#allocation8 + $0x10] sm:$0xff]
    %v705 = vld [vmem:[#allocation8 + $0x18] sm:$0xff]
    %v706 = vld [vmem:[#allocation8 + $0x20] sm:$0xff]
    %v707 = vld [vmem:[#allocation8 + $0x28] sm:$0xff]
    %v708 = vld [vmem:[#allocation8 + $0x30] sm:$0xff]
    %v709 = vld [vmem:[#allocation8 + $0x38] sm:$0xff]
    %v710 = vld [vmem:[#allocation8 + $0x40] sm:$0xff]
    %v711 = vld [vmem:[#allocation8 + $0x48] sm:$0xff]
    %v712 = vld [vmem:[#allocation8 + $0x50] sm:$0xff]
    %v713 = vld [vmem:[#allocation8 + $0x58] sm:$0xff]
    %v714 = vld [vmem:[#allocation8 + $0x60] sm:$0xff]
    %v715 = vld [vmem:[#allocation8 + $0x68] sm:$0xff]
    %v716 = vld [vmem:[#allocation8 + $0x70] sm:$0xff]
    %v717 = vld [vmem:[#allocation8 + $0x78] sm:$0xff]
    %v718 = vld [vmem:[#allocation8 + $0x80] sm:$0xff]
    %v719 = vld [vmem:[#allocation8 + $0x88] sm:$0xff]
    %v720 = vld [vmem:[#allocation8 + $0x90] sm:$0xff]
    %v721 = vld [vmem:[#allocation8 + $0x98] sm:$0xff]
    %v722 = vld [vmem:[#allocation8 + $0xa0] sm:$0xff]
    %v723 = vld [vmem:[#allocation8 + $0xa8] sm:$0xff]
    %v724 = vld [vmem:[#allocation8 + $0xb0] sm:$0xff]
    %v725 = vld [vmem:[#allocation8 + $0xb8] sm:$0xff]
    %v726 = vld [vmem:[#allocation8 + $0xc0] sm:$0xff]
    %v727 = vld [vmem:[#allocation8 + $0xc8] sm:$0xff]
    %v728 = vld [vmem:[#allocation8 + $0xd0] sm:$0xff]
    %v729 = vld [vmem:[#allocation8 + $0xd8] sm:$0xff]
    %v730 = vld [vmem:[#allocation8 + $0xe0] sm:$0xff]
    %v731 = vld [vmem:[#allocation8 + $0xe8] sm:$0xff]
    %v732 = vld [vmem:[#allocation8 + $0xf0] sm:$0xff]
    %v733 = vld [vmem:[#allocation8 + $0xf8] sm:$0xff]
    %v734 = vld [vmem:[#allocation8 + $0x100] sm:$0xff]
    %v735 = vld [vmem:[#allocation8 + $0x108] sm:$0xff]
    %v736 = vld [vmem:[#allocation8 + $0x110] sm:$0xff]
    %v737 = vld [vmem:[#allocation8 + $0x118] sm:$0xff]
    %v738 = vld [vmem:[#allocation8 + $0x120] sm:$0xff]
    %v739 = vld [vmem:[#allocation8 + $0x128] sm:$0xff]
    %v740 = vld [vmem:[#allocation8 + $0x130] sm:$0xff]
    %v741 = vld [vmem:[#allocation8 + $0x138] sm:$0xff]
    %v742 = vld [vmem:[#allocation8 + $0x140] sm:$0xff]
    %v743 = vld [vmem:[#allocation8 + $0x148] sm:$0xff]
    %v744 = vld [vmem:[#allocation8 + $0x150] sm:$0xff]
    %v745 = vld [vmem:[#allocation8 + $0x158] sm:$0xff]
    %v746 = vld [vmem:[#allocation8 + $0x160] sm:$0xff]
    %v747 = vld [vmem:[#allocation8 + $0x168] sm:$0xff]
    %v748 = vld [vmem:[#allocation8 + $0x170] sm:$0xff]
    %v749 = vld [vmem:[#allocation8 + $0x178] sm:$0xff]
    %v750 = vld [vmem:[#allocation10] sm:$0x3]
    %v752 = vperm.slane %v750, 0
    %v753 = vperm.slane %v750, 1
    %v804 = vunpack.c.l.b16 %v702
    %v805 = vunpack.c.h.b16 %v702
    %v806 = vunpack.c.l.b16 %v703
    %v807 = vunpack.c.h.b16 %v703
    %v808 = vunpack.c.l.b16 %v704
    %v809 = vunpack.c.h.b16 %v704
    %v810 = vunpack.c.l.b16 %v705
    %v811 = vunpack.c.h.b16 %v705
    %v812 = vunpack.c.l.b16 %v706
    %v813 = vunpack.c.h.b16 %v706
    %v814 = vunpack.c.l.b16 %v707
    %v815 = vunpack.c.h.b16 %v707
    %v816 = vunpack.c.l.b16 %v708
    %v817 = vunpack.c.h.b16 %v708
    %v818 = vunpack.c.l.b16 %v709
    %v819 = vunpack.c.h.b16 %v709
    %v820 = vunpack.c.l.b16 %v710
    %v821 = vunpack.c.h.b16 %v710
    %v822 = vunpack.c.l.b16 %v711
    %v823 = vunpack.c.h.b16 %v711
    %v824 = vunpack.c.l.b16 %v712
    %v825 = vunpack.c.h.b16 %v712
    %v826 = vunpack.c.l.b16 %v713
    %v827 = vunpack.c.h.b16 %v713
    %v828 = vunpack.c.l.b16 %v714
    %v829 = vunpack.c.h.b16 %v714
    %v830 = vunpack.c.l.b16 %v715
    %v831 = vunpack.c.h.b16 %v715
    %v832 = vunpack.c.l.b16 %v716
    %v833 = vunpack.c.h.b16 %v716
    %v834 = vunpack.c.l.b16 %v717
    %v835 = vunpack.c.h.b16 %v717
    %v836 = vunpack.c.l.b16 %v718
    %v837 = vunpack.c.h.b16 %v718
    %v838 = vunpack.c.l.b16 %v719
    %v839 = vunpack.c.h.b16 %v719
    %v840 = vunpack.c.l.b16 %v720
    %v841 = vunpack.c.h.b16 %v720
    %v842 = vunpack.c.l.b16 %v721
    %v843 = vunpack.c.h.b16 %v721
    %v844 = vunpack.c.l.b16 %v722
    %v845 = vunpack.c.h.b16 %v722
    %v846 = vunpack.c.l.b16 %v723
    %v847 = vunpack.c.h.b16 %v723
    %v848 = vunpack.c.l.b16 %v724
    %v849 = vunpack.c.h.b16 %v724
    %v850 = vunpack.c.l.b16 %v725
    %v851 = vunpack.c.h.b16 %v725
    %v852 = vunpack.c.l.b16 %v726
    %v853 = vunpack.c.h.b16 %v726
    %v854 = vunpack.c.l.b16 %v727
    %v855 = vunpack.c.h.b16 %v727
    %v856 = vunpack.c.l.b16 %v728
    %v857 = vunpack.c.h.b16 %v728
    %v858 = vunpack.c.l.b16 %v729
    %v859 = vunpack.c.h.b16 %v729
    %v860 = vunpack.c.l.b16 %v730
    %v861 = vunpack.c.h.b16 %v730
    %v862 = vunpack.c.l.b16 %v731
    %v863 = vunpack.c.h.b16 %v731
    %v864 = vunpack.c.l.b16 %v732
    %v865 = vunpack.c.h.b16 %v732
    %v866 = vunpack.c.l.b16 %v733
    %v867 = vunpack.c.h.b16 %v733
    %v868 = vunpack.c.l.b16 %v734
    %v869 = vunpack.c.h.b16 %v734
    %v870 = vunpack.c.l.b16 %v735
    %v871 = vunpack.c.h.b16 %v735
    %v872 = vunpack.c.l.b16 %v736
    %v873 = vunpack.c.h.b16 %v736
    %v874 = vunpack.c.l.b16 %v737
    %v875 = vunpack.c.h.b16 %v737
    %v876 = vunpack.c.l.b16 %v738
    %v877 = vunpack.c.h.b16 %v738
    %v878 = vunpack.c.l.b16 %v739
    %v879 = vunpack.c.h.b16 %v739
    %v880 = vunpack.c.l.b16 %v740
    %v881 = vunpack.c.h.b16 %v740
    %v882 = vunpack.c.l.b16 %v741
    %v883 = vunpack.c.h.b16 %v741
    %v884 = vunpack.c.l.b16 %v742
    %v885 = vunpack.c.h.b16 %v742
    %v886 = vunpack.c.l.b16 %v743
    %v887 = vunpack.c.h.b16 %v743
    %v888 = vunpack.c.l.b16 %v744
    %v889 = vunpack.c.h.b16 %v744
    %v890 = vunpack.c.l.b16 %v745
    %v891 = vunpack.c.h.b16 %v745
    %v892 = vunpack.c.l.b16 %v746
    %v893 = vunpack.c.h.b16 %v746
    %v894 = vunpack.c.l.b16 %v747
    %v895 = vunpack.c.h.b16 %v747
    %v896 = vunpack.c.l.b16 %v748
    %v897 = vunpack.c.h.b16 %v748
    %v898 = vunpack.c.l.b16 %v749
    %v899 = vunpack.c.h.b16 %v749
    %v900 = vpack.c.b16 %v806, %v804
    %v901 = vpack.c.b16 %v807, %v805
    %v902 = vpack.c.b16 %v810, %v808
    %v903 = vpack.c.b16 %v811, %v809
    %v904 = vpack.c.b16 %v814, %v812
    %v905 = vpack.c.b16 %v815, %v813
    %v906 = vpack.c.b16 %v818, %v816
    %v907 = vpack.c.b16 %v819, %v817
    %v908 = vpack.c.b16 %v822, %v820
    %v909 = vpack.c.b16 %v823, %v821
    %v910 = vpack.c.b16 %v826, %v824
    %v911 = vpack.c.b16 %v827, %v825
    %v912 = vpack.c.b16 %v830, %v828
    %v913 = vpack.c.b16 %v831, %v829
    %v914 = vpack.c.b16 %v834, %v832
    %v915 = vpack.c.b16 %v835, %v833
    %v916 = vpack.c.b16 %v838, %v836
    %v917 = vpack.c.b16 %v839, %v837
    %v918 = vpack.c.b16 %v842, %v840
    %v919 = vpack.c.b16 %v843, %v841
    %v920 = vpack.c.b16 %v846, %v844
    %v921 = vpack.c.b16 %v847, %v845
    %v922 = vpack.c.b16 %v850, %v848
    %v923 = vpack.c.b16 %v851, %v849
    %v924 = vpack.c.b16 %v854, %v852
    %v925 = vpack.c.b16 %v855, %v853
    %v926 = vpack.c.b16 %v858, %v856
    %v927 = vpack.c.b16 %v859, %v857
    %v928 = vpack.c.b16 %v862, %v860
    %v929 = vpack.c.b16 %v863, %v861
    %v930 = vpack.c.b16 %v866, %v864
    %v931 = vpack.c.b16 %v867, %v865
    %v932 = vpack.c.b16 %v870, %v868
    %v933 = vpack.c.b16 %v871, %v869
    %v934 = vpack.c.b16 %v874, %v872
    %v935 = vpack.c.b16 %v875, %v873
    %v936 = vpack.c.b16 %v878, %v876
    %v937 = vpack.c.b16 %v879, %v877
    %v938 = vpack.c.b16 %v882, %v880
    %v939 = vpack.c.b16 %v883, %v881
    %v940 = vpack.c.b16 %v886, %v884
    %v941 = vpack.c.b16 %v887, %v885
    %v942 = vpack.c.b16 %v890, %v888
    %v943 = vpack.c.b16 %v891, %v889
    %v944 = vpack.c.b16 %v894, %v892
    %v945 = vpack.c.b16 %v895, %v893
    %v946 = vpack.c.b16 %v898, %v896
    %v947 = vpack.c.b16 %v899, %v897
    %996 = vmatpush.bf16.msra.mxu0 %v914
    %997 = vmatpush.bf16.msra.mxu0 %v912
    %998 = vmatpush.bf16.msra.mxu0 %v910
    %999 = vmatpush.bf16.msra.mxu0 %v908
    %1000 = vmatpush.bf16.msra.mxu0 %v906
    %1001 = vmatpush.bf16.msra.mxu0 %v904
    %1002 = vmatpush.bf16.msra.mxu0 %v902
    %1003 = vmatpush.bf16.msra.mxu0 %v900
    %1004 = vmatmul.bf16.gmra.mxu0 %v699
    %v1005 = vpop.f32.mrf.mxu0
    %v1006 = vadd.f32 %v752, %v1005
    %v1007 = vpop.f32.mrf.mxu0
    %v1008 = vadd.f32 %v752, %v1007
    %1009 = vdwg.mxu0
    %1010 = vmatpush.bf16.msra.mxu0 %v930
    %1011 = vmatpush.bf16.msra.mxu0 %v928
    %1012 = vmatpush.bf16.msra.mxu0 %v926
    %1013 = vmatpush.bf16.msra.mxu0 %v924
    %1014 = vmatpush.bf16.msra.mxu0 %v922
    %1015 = vmatpush.bf16.msra.mxu0 %v920
    %1016 = vmatpush.bf16.msra.mxu0 %v918
    %1017 = vmatpush.bf16.msra.mxu0 %v916
    %1018 = vmatmul.bf16.gmra.mxu0 %v700
    %v1019 = vpop.f32.mrf.mxu0
    %v1020 = vadd.f32 %v1006, %v1019
    %v1021 = vpop.f32.mrf.mxu0
    %v1022 = vadd.f32 %v1008, %v1021
    %1023 = vdwg.mxu0
    %1024 = vmatpush.bf16.msra.mxu0 %v946
    %1025 = vmatpush.bf16.msra.mxu0 %v944
    %1026 = vmatpush.bf16.msra.mxu0 %v942
    %1027 = vmatpush.bf16.msra.mxu0 %v940
    %1028 = vmatpush.bf16.msra.mxu0 %v938
    %1029 = vmatpush.bf16.msra.mxu0 %v936
    %1030 = vmatpush.bf16.msra.mxu0 %v934
    %1031 = vmatpush.bf16.msra.mxu0 %v932
    %1032 = vmatmul.bf16.gmra.mxu0 %v701
    %v1033 = vpop.f32.mrf.mxu0
    %v1034 = vadd.f32 %v1020, %v1033
    %v1035 = vpop.f32.mrf.mxu0
    %v1036 = vadd.f32 %v1022, %v1035
    %1037 = vdwg.mxu0
    %1038 = vmatpush.bf16.msra.mxu0 %v915
    %1039 = vmatpush.bf16.msra.mxu0 %v913
    %1040 = vmatpush.bf16.msra.mxu0 %v911
    %1041 = vmatpush.bf16.msra.mxu0 %v909
    %1042 = vmatpush.bf16.msra.mxu0 %v907
    %1043 = vmatpush.bf16.msra.mxu0 %v905
    %1044 = vmatpush.bf16.msra.mxu0 %v903
    %1045 = vmatpush.bf16.msra.mxu0 %v901
    %1046 = vmatmul.bf16.gmra.mxu0 %v699
    %v1047 = vpop.f32.mrf.mxu0
    %v1048 = vadd.f32 %v753, %v1047
    %v1049 = vpop.f32.mrf.mxu0
    %v1050 = vadd.f32 %v753, %v1049
    %1051 = vdwg.mxu0
    %1052 = vmatpush.bf16.msra.mxu0 %v931
    %1053 = vmatpush.bf16.msra.mxu0 %v929
    %1054 = vmatpush.bf16.msra.mxu0 %v927
    %1055 = vmatpush.bf16.msra.mxu0 %v925
    %1056 = vmatpush.bf16.msra.mxu0 %v923
    %1057 = vmatpush.bf16.msra.mxu0 %v921
    %1058 = vmatpush.bf16.msra.mxu0 %v919
    %1059 = vmatpush.bf16.msra.mxu0 %v917
    %1060 = vmatmul.bf16.gmra.mxu0 %v700
    %v1061 = vpop.f32.mrf.mxu0
    %v1062 = vadd.f32 %v1048, %v1061
    %v1063 = vpop.f32.mrf.mxu0
    %v1064 = vadd.f32 %v1050, %v1063
    %1065 = vdwg.mxu0
    %1066 = vmatpush.bf16.msra.mxu0 %v947
    %1067 = vmatpush.bf16.msra.mxu0 %v945
    %1068 = vmatpush.bf16.msra.mxu0 %v943
    %1069 = vmatpush.bf16.msra.mxu0 %v941
    %1070 = vmatpush.bf16.msra.mxu0 %v939
    %1071 = vmatpush.bf16.msra.mxu0 %v937
    %1072 = vmatpush.bf16.msra.mxu0 %v935
    %1073 = vmatpush.bf16.msra.mxu0 %v933
    %1074 = vmatmul.bf16.gmra.mxu0 %v701
    %v1075 = vpop.f32.mrf.mxu0
    %v1076 = vadd.f32 %v1062, %v1075
    %v1077 = vpop.f32.mrf.mxu0
    %v1078 = vadd.f32 %v1064, %v1077
    %1079 = vdwg.mxu0
    %v1080 = vmax.f32 %v1034, 0.0
    %v1081 = vmax.f32 %v1076, 0.0
    %v1082 = vmax.f32 %v1036, 0.0
    %v1083 = vmax.f32 %v1078, 0.0
    %v1084 = vrot.slane %v1080, 1
    %v1085 = vrot.slane %v1081, 1
    %v1086 = vrot.slane %v1082, 1
    %v1087 = vrot.slane %v1083, 1
    %v1088 = vsel %vm260, %v1084, %v1086
    %v1089 = vsel %vm260, %v1085, %v1087
    %v1090 = vsel %vm260, %v1086, %v1084
    %v1091 = vsel %vm260, %v1087, %v1085
    %v1092 = vmax.f32 %v1080, %v1088
    %v1093 = vmax.f32 %v1081, %v1089
    %v1094 = vmax.f32 %v1082, %v1090
    %v1095 = vmax.f32 %v1083, %v1091
    %v1096 = vld [vmem:[%s9] sm:$0xf]
    %v1097 = vpack.c.bf16 %v1094, %v1092
    %v1098 = vpack.c.bf16 %v1095, %v1093
    %v1100 = vsel %vm317, %v1096, 0
    %1102 = vmatpush.bf16.msra.mxu0 0
    %1103 = vmatpush.bf16.msra.mxu0 0
    %1104 = vmatpush.bf16.msra.mxu0 0
    %1105 = vmatpush.bf16.msra.mxu0 0
    %1106 = vmatpush.bf16.msra.mxu0 0
    %1107 = vmatpush.bf16.msra.mxu0 0
    %1108 = vmatpush.bf16.msra.mxu0 0
    %1109 = vmatpush.bf16.msra.mxu0 %v1097
    %1110 = vmatmul.bf16.gmra.mxu0 %v1100
    %v1111 = vpop.f32.mrf.mxu0
    %v1112 = vadd.f32 0.0, %v1111
    %v1113 = vpop.f32.mrf.mxu0
    %1114 = vdwg.mxu0
    %1115 = vmatpush.bf16.msra.mxu0 0
    %1116 = vmatpush.bf16.msra.mxu0 0
    %1117 = vmatpush.bf16.msra.mxu0 0
    %1118 = vmatpush.bf16.msra.mxu0 0
    %1119 = vmatpush.bf16.msra.mxu0 0
    %1120 = vmatpush.bf16.msra.mxu0 0
    %1121 = vmatpush.bf16.msra.mxu0 0
    %1122 = vmatpush.bf16.msra.mxu0 %v1098
    %1123 = vmatmul.bf16.gmra.mxu0 %v1100
    %v1124 = vpop.f32.mrf.mxu0
    %v1125 = vadd.f32 0.0, %v1124
    %v1126 = vpop.f32.mrf.mxu0
    %1127 = vdwg.mxu0
    %1128 = vrot.lane.b32.xlu0 %v1112, 96
    %v1129 = vpop.permute.xlu0 %1128
    %1130 = vrot.lane.b32.xlu0 %v1125, 96
    %v1131 = vpop.permute.xlu0 %1130
    %vm1132 = vcmp.lt.s32.totalorder %v499, 96
    %v1133 = vsel %vm1132, %v1129, %v1131
    %v1134 = vsel %vm1132, %v1131, %v1129
    %v1135 = vmax.f32 %v1112, %v1133
    %v1136 = vmax.f32 %v1125, %v1134
    %v1137 = vpack.c.bf16 %v1135, %v1135
    %v1138 = vpack.c.bf16 %v1136, %v1136
    %v1139 = vld [vmem:[#allocation11] sm:$0xf]
    %v1140 = vld [vmem:[#allocation11 + $0x4] sm:$0xf]
    %v1141 = vld [vmem:[#allocation11 + $0x8] sm:$0xf]
    %v1142 = vld [vmem:[#allocation11 + $0xc] sm:$0xf]
    %v1143 = vld [vmem:[#allocation11 + $0x10] sm:$0xf]
    %v1144 = vld [vmem:[#allocation11 + $0x14] sm:$0xf]
    %v1145 = vld [vmem:[#allocation11 + $0x18] sm:$0xf]
    %v1146 = vld [vmem:[#allocation11 + $0x1c] sm:$0xf]
    %v1147 = vld [vmem:[#allocation11 + $0x20] sm:$0xf]
    %v1148 = vld [vmem:[#allocation11 + $0x24] sm:$0xf]
    %v1149 = vld [vmem:[#allocation11 + $0x28] sm:$0xf]
    %v1150 = vld [vmem:[#allocation11 + $0x2c] sm:$0xf]
    %v1151 = vld [vmem:[#allocation11 + $0x30] sm:$0xf]
    %v1152 = vld [vmem:[#allocation11 + $0x34] sm:$0xf]
    %v1153 = vld [vmem:[#allocation11 + $0x38] sm:$0xf]
    %v1154 = vld [vmem:[#allocation11 + $0x3c] sm:$0xf]
    %v1155 = vld [vmem:[#allocation11 + $0x40] sm:$0xf]
    %v1156 = vld [vmem:[#allocation11 + $0x44] sm:$0xf]
    %v1157 = vld [vmem:[#allocation11 + $0x48] sm:$0xf]
    %v1158 = vld [vmem:[#allocation11 + $0x4c] sm:$0xf]
    %v1159 = vld [vmem:[#allocation11 + $0x50] sm:$0xf]
    %v1160 = vld [vmem:[#allocation11 + $0x54] sm:$0xf]
    %v1161 = vld [vmem:[#allocation11 + $0x58] sm:$0xf]
    %v1162 = vld [vmem:[#allocation11 + $0x5c] sm:$0xf]
    %v1163 = vld [vmem:[#allocation11 + $0x60] sm:$0xf]
    %v1164 = vld [vmem:[#allocation11 + $0x64] sm:$0xf]
    %v1165 = vld [vmem:[#allocation11 + $0x68] sm:$0xf]
    %v1166 = vld [vmem:[#allocation11 + $0x6c] sm:$0xf]
    %v1167 = vld [vmem:[#allocation11 + $0x70] sm:$0xf]
    %v1168 = vld [vmem:[#allocation11 + $0x74] sm:$0xf]
    %v1169 = vld [vmem:[#allocation11 + $0x78] sm:$0xf]
    %v1170 = vld [vmem:[#allocation11 + $0x7c] sm:$0xf]
    %v1203 = vunpack.c.l.b16 %v1139
    %v1204 = vunpack.c.l.b16 %v1140
    %v1205 = vunpack.c.l.b16 %v1141
    %v1206 = vunpack.c.l.b16 %v1142
    %v1207 = vunpack.c.l.b16 %v1143
    %v1208 = vunpack.c.l.b16 %v1144
    %v1209 = vunpack.c.l.b16 %v1145
    %v1210 = vunpack.c.l.b16 %v1146
    %v1211 = vunpack.c.l.b16 %v1147
    %v1212 = vunpack.c.l.b16 %v1148
    %v1213 = vunpack.c.l.b16 %v1149
    %v1214 = vunpack.c.l.b16 %v1150
    %v1215 = vunpack.c.l.b16 %v1151
    %v1216 = vunpack.c.l.b16 %v1152
    %v1217 = vunpack.c.l.b16 %v1153
    %v1218 = vunpack.c.l.b16 %v1154
    %v1219 = vunpack.c.l.b16 %v1155
    %v1220 = vunpack.c.l.b16 %v1156
    %v1221 = vunpack.c.l.b16 %v1157
    %v1222 = vunpack.c.l.b16 %v1158
    %v1223 = vunpack.c.l.b16 %v1159
    %v1224 = vunpack.c.l.b16 %v1160
    %v1225 = vunpack.c.l.b16 %v1161
    %v1226 = vunpack.c.l.b16 %v1162
    %v1227 = vunpack.c.l.b16 %v1163
    %v1228 = vunpack.c.l.b16 %v1164
    %v1229 = vunpack.c.l.b16 %v1165
    %v1230 = vunpack.c.l.b16 %v1166
    %v1231 = vunpack.c.l.b16 %v1167
    %v1232 = vunpack.c.l.b16 %v1168
    %v1233 = vunpack.c.l.b16 %v1169
    %v1234 = vunpack.c.l.b16 %v1170
    %v1235 = vpack.c.b16 %v1204, %v1203
    %v1236 = vpack.c.b16 %v1206, %v1205
    %v1237 = vpack.c.b16 %v1208, %v1207
    %v1238 = vpack.c.b16 %v1210, %v1209
    %v1239 = vpack.c.b16 %v1212, %v1211
    %v1240 = vpack.c.b16 %v1214, %v1213
    %v1241 = vpack.c.b16 %v1216, %v1215
    %v1242 = vpack.c.b16 %v1218, %v1217
    %v1243 = vpack.c.b16 %v1220, %v1219
    %v1244 = vpack.c.b16 %v1222, %v1221
    %v1245 = vpack.c.b16 %v1224, %v1223
    %v1246 = vpack.c.b16 %v1226, %v1225
    %v1247 = vpack.c.b16 %v1228, %v1227
    %v1248 = vpack.c.b16 %v1230, %v1229
    %v1249 = vpack.c.b16 %v1232, %v1231
    %v1250 = vpack.c.b16 %v1234, %v1233
    %1267 = vmatpush.bf16.msra.mxu0 %v1242
    %1268 = vmatpush.bf16.msra.mxu0 %v1241
    %1269 = vmatpush.bf16.msra.mxu0 %v1240
    %1270 = vmatpush.bf16.msra.mxu0 %v1239
    %1271 = vmatpush.bf16.msra.mxu0 %v1238
    %1272 = vmatpush.bf16.msra.mxu0 %v1237
    %1273 = vmatpush.bf16.msra.mxu0 %v1236
    %1274 = vmatpush.bf16.msra.mxu0 %v1235
    %1275 = vmatmul.bf16.gmra.mxu0 %v1137
    %v1276 = vpop.f32.mrf.mxu0
    %v1277 = vadd.f32 0.0, %v1276
    %v1278 = vpop.f32.mrf.mxu0
    %1279 = vdwg.mxu0
    %1280 = vmatpush.bf16.msra.mxu0 %v1250
    %1281 = vmatpush.bf16.msra.mxu0 %v1249
    %1282 = vmatpush.bf16.msra.mxu0 %v1248
    %1283 = vmatpush.bf16.msra.mxu0 %v1247
    %1284 = vmatpush.bf16.msra.mxu0 %v1246
    %1285 = vmatpush.bf16.msra.mxu0 %v1245
    %1286 = vmatpush.bf16.msra.mxu0 %v1244
    %1287 = vmatpush.bf16.msra.mxu0 %v1243
    %1288 = vmatmul.bf16.gmra.mxu0 %v1138
    %v1289 = vpop.f32.mrf.mxu0
    %v1290 = vadd.f32 %v1277, %v1289
    %v1291 = vpop.f32.mrf.mxu0
    %1292 = vdwg.mxu0
    %s1293 = smul.u32 4, 48
    %s1294 = smul.u32 %s1293, 2
    %s1295 = sshll.u32 %s1294, 4
    %1296 = dma.done [#allocation4], %s1295
    %v1297 = vrot.slane %v1290, 7
    %v1298 = vld [vmem:[%s13] sm:$0xff]
    %1300 = vset.pattern.permute.xlu0 0
    %1301 = vperm.xlu0 %1300, %v1298
    %v1302 = vpop.permute.xlu0 %1301
    %v1304 = vmul.f32 %v1297, %v1302
    %v1305 = vrot.slane %v1290, 1
    %1306 = vset.pattern.permute.xlu0 1
    %1307 = vperm.xlu0 %1306, %v1298
    %v1308 = vpop.permute.xlu0 %1307
    %v1310 = vmul.f32 %v1305, %v1308
    %v1311 = vpack.c.bf16 %v1304, %v1304
    %v1312 = vpack.c.bf16 %v1290, %v1290
    %v1313 = vpack.c.bf16 %v1310, %v1310
    %v1314 = vld [vmem:[#allocation2] sm:$0xff]
    %v1315 = vld [vmem:[#allocation2 + $0x8] sm:$0xff]
    %v1316 = vld [vmem:[#allocation2 + $0x10] sm:$0xff]
    %v1317 = vld [vmem:[#allocation2 + $0x18] sm:$0xff]
    %v1318 = vld [vmem:[#allocation2 + $0x20] sm:$0xff]
    %v1319 = vld [vmem:[#allocation2 + $0x28] sm:$0xff]
    %v1320 = vld [vmem:[#allocation2 + $0x30] sm:$0xff]
    %v1321 = vld [vmem:[#allocation2 + $0x38] sm:$0xff]
    %v1322 = vld [vmem:[#allocation2 + $0x40] sm:$0xff]
    %v1323 = vld [vmem:[#allocation2 + $0x48] sm:$0xff]
    %v1324 = vld [vmem:[#allocation2 + $0x50] sm:$0xff]
    %v1325 = vld [vmem:[#allocation2 + $0x58] sm:$0xff]
    %v1326 = vld [vmem:[#allocation2 + $0x60] sm:$0xff]
    %v1327 = vld [vmem:[#allocation2 + $0x68] sm:$0xff]
    %v1328 = vld [vmem:[#allocation2 + $0x70] sm:$0xff]
    %v1329 = vld [vmem:[#allocation2 + $0x78] sm:$0xff]
    %v1330 = vld [vmem:[#allocation2 + $0x80] sm:$0xff]
    %v1331 = vld [vmem:[#allocation2 + $0x88] sm:$0xff]
    %v1332 = vld [vmem:[#allocation2 + $0x90] sm:$0xff]
    %v1333 = vld [vmem:[#allocation2 + $0x98] sm:$0xff]
    %v1334 = vld [vmem:[#allocation2 + $0xa0] sm:$0xff]
    %v1335 = vld [vmem:[#allocation2 + $0xa8] sm:$0xff]
    %v1336 = vld [vmem:[#allocation2 + $0xb0] sm:$0xff]
    %v1337 = vld [vmem:[#allocation2 + $0xb8] sm:$0xff]
    %v1338 = vld [vmem:[#allocation2 + $0xc0] sm:$0xff]
    %v1339 = vld [vmem:[#allocation2 + $0xc8] sm:$0xff]
    %v1340 = vld [vmem:[#allocation2 + $0xd0] sm:$0xff]
    %v1341 = vld [vmem:[#allocation2 + $0xd8] sm:$0xff]
    %v1342 = vld [vmem:[#allocation2 + $0xe0] sm:$0xff]
    %v1343 = vld [vmem:[#allocation2 + $0xe8] sm:$0xff]
    %v1344 = vld [vmem:[#allocation2 + $0xf0] sm:$0xff]
    %v1345 = vld [vmem:[#allocation2 + $0xf8] sm:$0xff]
    %v1346 = vld [vmem:[#allocation2 + $0x100] sm:$0xff]
    %v1347 = vld [vmem:[#allocation2 + $0x108] sm:$0xff]
    %v1348 = vld [vmem:[#allocation2 + $0x110] sm:$0xff]
    %v1349 = vld [vmem:[#allocation2 + $0x118] sm:$0xff]
    %v1350 = vld [vmem:[#allocation2 + $0x120] sm:$0xff]
    %v1351 = vld [vmem:[#allocation2 + $0x128] sm:$0xff]
    %v1352 = vld [vmem:[#allocation2 + $0x130] sm:$0xff]
    %v1353 = vld [vmem:[#allocation2 + $0x138] sm:$0xff]
    %v1354 = vld [vmem:[#allocation2 + $0x140] sm:$0xff]
    %v1355 = vld [vmem:[#allocation2 + $0x148] sm:$0xff]
    %v1356 = vld [vmem:[#allocation2 + $0x150] sm:$0xff]
    %v1357 = vld [vmem:[#allocation2 + $0x158] sm:$0xff]
    %v1358 = vld [vmem:[#allocation2 + $0x160] sm:$0xff]
    %v1359 = vld [vmem:[#allocation2 + $0x168] sm:$0xff]
    %v1360 = vld [vmem:[#allocation2 + $0x170] sm:$0xff]
    %v1361 = vld [vmem:[#allocation2 + $0x178] sm:$0xff]
    %v1362 = vld [vmem:[#allocation13] sm:$0x3]
    %v1364 = vperm.slane %v1362, 0
    %v1365 = vperm.slane %v1362, 1
    %v1416 = vunpack.c.l.b16 %v1314
    %v1417 = vunpack.c.h.b16 %v1314
    %v1418 = vunpack.c.l.b16 %v1315
    %v1419 = vunpack.c.h.b16 %v1315
    %v1420 = vunpack.c.l.b16 %v1316
    %v1421 = vunpack.c.h.b16 %v1316
    %v1422 = vunpack.c.l.b16 %v1317
    %v1423 = vunpack.c.h.b16 %v1317
    %v1424 = vunpack.c.l.b16 %v1318
    %v1425 = vunpack.c.h.b16 %v1318
    %v1426 = vunpack.c.l.b16 %v1319
    %v1427 = vunpack.c.h.b16 %v1319
    %v1428 = vunpack.c.l.b16 %v1320
    %v1429 = vunpack.c.h.b16 %v1320
    %v1430 = vunpack.c.l.b16 %v1321
    %v1431 = vunpack.c.h.b16 %v1321
    %v1432 = vunpack.c.l.b16 %v1322
    %v1433 = vunpack.c.h.b16 %v1322
    %v1434 = vunpack.c.l.b16 %v1323
    %v1435 = vunpack.c.h.b16 %v1323
    %v1436 = vunpack.c.l.b16 %v1324
    %v1437 = vunpack.c.h.b16 %v1324
    %v1438 = vunpack.c.l.b16 %v1325
    %v1439 = vunpack.c.h.b16 %v1325
    %v1440 = vunpack.c.l.b16 %v1326
    %v1441 = vunpack.c.h.b16 %v1326
    %v1442 = vunpack.c.l.b16 %v1327
    %v1443 = vunpack.c.h.b16 %v1327
    %v1444 = vunpack.c.l.b16 %v1328
    %v1445 = vunpack.c.h.b16 %v1328
    %v1446 = vunpack.c.l.b16 %v1329
    %v1447 = vunpack.c.h.b16 %v1329
    %v1448 = vunpack.c.l.b16 %v1330
    %v1449 = vunpack.c.h.b16 %v1330
    %v1450 = vunpack.c.l.b16 %v1331
    %v1451 = vunpack.c.h.b16 %v1331
    %v1452 = vunpack.c.l.b16 %v1332
    %v1453 = vunpack.c.h.b16 %v1332
    %v1454 = vunpack.c.l.b16 %v1333
    %v1455 = vunpack.c.h.b16 %v1333
    %v1456 = vunpack.c.l.b16 %v1334
    %v1457 = vunpack.c.h.b16 %v1334
    %v1458 = vunpack.c.l.b16 %v1335
    %v1459 = vunpack.c.h.b16 %v1335
    %v1460 = vunpack.c.l.b16 %v1336
    %v1461 = vunpack.c.h.b16 %v1336
    %v1462 = vunpack.c.l.b16 %v1337
    %v1463 = vunpack.c.h.b16 %v1337
    %v1464 = vunpack.c.l.b16 %v1338
    %v1465 = vunpack.c.h.b16 %v1338
    %v1466 = vunpack.c.l.b16 %v1339
    %v1467 = vunpack.c.h.b16 %v1339
    %v1468 = vunpack.c.l.b16 %v1340
    %v1469 = vunpack.c.h.b16 %v1340
    %v1470 = vunpack.c.l.b16 %v1341
    %v1471 = vunpack.c.h.b16 %v1341
    %v1472 = vunpack.c.l.b16 %v1342
    %v1473 = vunpack.c.h.b16 %v1342
    %v1474 = vunpack.c.l.b16 %v1343
    %v1475 = vunpack.c.h.b16 %v1343
    %v1476 = vunpack.c.l.b16 %v1344
    %v1477 = vunpack.c.h.b16 %v1344
    %v1478 = vunpack.c.l.b16 %v1345
    %v1479 = vunpack.c.h.b16 %v1345
    %v1480 = vunpack.c.l.b16 %v1346
    %v1481 = vunpack.c.h.b16 %v1346
    %v1482 = vunpack.c.l.b16 %v1347
    %v1483 = vunpack.c.h.b16 %v1347
    %v1484 = vunpack.c.l.b16 %v1348
    %v1485 = vunpack.c.h.b16 %v1348
    %v1486 = vunpack.c.l.b16 %v1349
    %v1487 = vunpack.c.h.b16 %v1349
    %v1488 = vunpack.c.l.b16 %v1350
    %v1489 = vunpack.c.h.b16 %v1350
    %v1490 = vunpack.c.l.b16 %v1351
    %v1491 = vunpack.c.h.b16 %v1351
    %v1492 = vunpack.c.l.b16 %v1352
    %v1493 = vunpack.c.h.b16 %v1352
    %v1494 = vunpack.c.l.b16 %v1353
    %v1495 = vunpack.c.h.b16 %v1353
    %v1496 = vunpack.c.l.b16 %v1354
    %v1497 = vunpack.c.h.b16 %v1354
    %v1498 = vunpack.c.l.b16 %v1355
    %v1499 = vunpack.c.h.b16 %v1355
    %v1500 = vunpack.c.l.b16 %v1356
    %v1501 = vunpack.c.h.b16 %v1356
    %v1502 = vunpack.c.l.b16 %v1357
    %v1503 = vunpack.c.h.b16 %v1357
    %v1504 = vunpack.c.l.b16 %v1358
    %v1505 = vunpack.c.h.b16 %v1358
    %v1506 = vunpack.c.l.b16 %v1359
    %v1507 = vunpack.c.h.b16 %v1359
    %v1508 = vunpack.c.l.b16 %v1360
    %v1509 = vunpack.c.h.b16 %v1360
    %v1510 = vunpack.c.l.b16 %v1361
    %v1511 = vunpack.c.h.b16 %v1361
    %v1512 = vpack.c.b16 %v1418, %v1416
    %v1513 = vpack.c.b16 %v1419, %v1417
    %v1514 = vpack.c.b16 %v1422, %v1420
    %v1515 = vpack.c.b16 %v1423, %v1421
    %v1516 = vpack.c.b16 %v1426, %v1424
    %v1517 = vpack.c.b16 %v1427, %v1425
    %v1518 = vpack.c.b16 %v1430, %v1428
    %v1519 = vpack.c.b16 %v1431, %v1429
    %v1520 = vpack.c.b16 %v1434, %v1432
    %v1521 = vpack.c.b16 %v1435, %v1433
    %v1522 = vpack.c.b16 %v1438, %v1436
    %v1523 = vpack.c.b16 %v1439, %v1437
    %v1524 = vpack.c.b16 %v1442, %v1440
    %v1525 = vpack.c.b16 %v1443, %v1441
    %v1526 = vpack.c.b16 %v1446, %v1444
    %v1527 = vpack.c.b16 %v1447, %v1445
    %v1528 = vpack.c.b16 %v1450, %v1448
    %v1529 = vpack.c.b16 %v1451, %v1449
    %v1530 = vpack.c.b16 %v1454, %v1452
    %v1531 = vpack.c.b16 %v1455, %v1453
    %v1532 = vpack.c.b16 %v1458, %v1456
    %v1533 = vpack.c.b16 %v1459, %v1457
    %v1534 = vpack.c.b16 %v1462, %v1460
    %v1535 = vpack.c.b16 %v1463, %v1461
    %v1536 = vpack.c.b16 %v1466, %v1464
    %v1537 = vpack.c.b16 %v1467, %v1465
    %v1538 = vpack.c.b16 %v1470, %v1468
    %v1539 = vpack.c.b16 %v1471, %v1469
    %v1540 = vpack.c.b16 %v1474, %v1472
    %v1541 = vpack.c.b16 %v1475, %v1473
    %v1542 = vpack.c.b16 %v1478, %v1476
    %v1543 = vpack.c.b16 %v1479, %v1477
    %v1544 = vpack.c.b16 %v1482, %v1480
    %v1545 = vpack.c.b16 %v1483, %v1481
    %v1546 = vpack.c.b16 %v1486, %v1484
    %v1547 = vpack.c.b16 %v1487, %v1485
    %v1548 = vpack.c.b16 %v1490, %v1488
    %v1549 = vpack.c.b16 %v1491, %v1489
    %v1550 = vpack.c.b16 %v1494, %v1492
    %v1551 = vpack.c.b16 %v1495, %v1493
    %v1552 = vpack.c.b16 %v1498, %v1496
    %v1553 = vpack.c.b16 %v1499, %v1497
    %v1554 = vpack.c.b16 %v1502, %v1500
    %v1555 = vpack.c.b16 %v1503, %v1501
    %v1556 = vpack.c.b16 %v1506, %v1504
    %v1557 = vpack.c.b16 %v1507, %v1505
    %v1558 = vpack.c.b16 %v1510, %v1508
    %v1559 = vpack.c.b16 %v1511, %v1509
    %1608 = vmatpush.bf16.msra.mxu0 %v1526
    %1609 = vmatpush.bf16.msra.mxu0 %v1524
    %1610 = vmatpush.bf16.msra.mxu0 %v1522
    %1611 = vmatpush.bf16.msra.mxu0 %v1520
    %1612 = vmatpush.bf16.msra.mxu0 %v1518
    %1613 = vmatpush.bf16.msra.mxu0 %v1516
    %1614 = vmatpush.bf16.msra.mxu0 %v1514
    %1615 = vmatpush.bf16.msra.mxu0 %v1512
    %1616 = vmatmul.bf16.gmra.mxu0 %v1311
    %v1617 = vpop.f32.mrf.mxu0
    %v1618 = vadd.f32 %v1364, %v1617
    %v1619 = vpop.f32.mrf.mxu0
    %1620 = vdwg.mxu0
    %1621 = vmatpush.bf16.msra.mxu0 %v1542
    %1622 = vmatpush.bf16.msra.mxu0 %v1540
    %1623 = vmatpush.bf16.msra.mxu0 %v1538
    %1624 = vmatpush.bf16.msra.mxu0 %v1536
    %1625 = vmatpush.bf16.msra.mxu0 %v1534
    %1626 = vmatpush.bf16.msra.mxu0 %v1532
    %1627 = vmatpush.bf16.msra.mxu0 %v1530
    %1628 = vmatpush.bf16.msra.mxu0 %v1528
    %1629 = vmatmul.bf16.gmra.mxu0 %v1312
    %v1630 = vpop.f32.mrf.mxu0
    %v1631 = vadd.f32 %v1618, %v1630
    %v1632 = vpop.f32.mrf.mxu0
    %1633 = vdwg.mxu0
    %1634 = vmatpush.bf16.msra.mxu0 %v1558
    %1635 = vmatpush.bf16.msra.mxu0 %v1556
    %1636 = vmatpush.bf16.msra.mxu0 %v1554
    %1637 = vmatpush.bf16.msra.mxu0 %v1552
    %1638 = vmatpush.bf16.msra.mxu0 %v1550
    %1639 = vmatpush.bf16.msra.mxu0 %v1548
    %1640 = vmatpush.bf16.msra.mxu0 %v1546
    %1641 = vmatpush.bf16.msra.mxu0 %v1544
    %1642 = vmatmul.bf16.gmra.mxu0 %v1313
    %v1643 = vpop.f32.mrf.mxu0
    %v1644 = vadd.f32 %v1631, %v1643
    %v1645 = vpop.f32.mrf.mxu0
    %1646 = vdwg.mxu0
    %1647 = vmatpush.bf16.msra.mxu0 %v1527
    %1648 = vmatpush.bf16.msra.mxu0 %v1525
    %1649 = vmatpush.bf16.msra.mxu0 %v1523
    %1650 = vmatpush.bf16.msra.mxu0 %v1521
    %1651 = vmatpush.bf16.msra.mxu0 %v1519
    %1652 = vmatpush.bf16.msra.mxu0 %v1517
    %1653 = vmatpush.bf16.msra.mxu0 %v1515
    %1654 = vmatpush.bf16.msra.mxu0 %v1513
    %1655 = vmatmul.bf16.gmra.mxu0 %v1311
    %v1656 = vpop.f32.mrf.mxu0
    %v1657 = vadd.f32 %v1365, %v1656
    %v1658 = vpop.f32.mrf.mxu0
    %1659 = vdwg.mxu0
    %1660 = vmatpush.bf16.msra.mxu0 %v1543
    %1661 = vmatpush.bf16.msra.mxu0 %v1541
    %1662 = vmatpush.bf16.msra.mxu0 %v1539
    %1663 = vmatpush.bf16.msra.mxu0 %v1537
    %1664 = vmatpush.bf16.msra.mxu0 %v1535
    %1665 = vmatpush.bf16.msra.mxu0 %v1533
    %1666 = vmatpush.bf16.msra.mxu0 %v1531
    %1667 = vmatpush.bf16.msra.mxu0 %v1529
    %1668 = vmatmul.bf16.gmra.mxu0 %v1312
    %v1669 = vpop.f32.mrf.mxu0
    %v1670 = vadd.f32 %v1657, %v1669
    %v1671 = vpop.f32.mrf.mxu0
    %1672 = vdwg.mxu0
    %1673 = vmatpush.bf16.msra.mxu0 %v1559
    %1674 = vmatpush.bf16.msra.mxu0 %v1557
    %1675 = vmatpush.bf16.msra.mxu0 %v1555
    %1676 = vmatpush.bf16.msra.mxu0 %v1553
    %1677 = vmatpush.bf16.msra.mxu0 %v1551
    %1678 = vmatpush.bf16.msra.mxu0 %v1549
    %1679 = vmatpush.bf16.msra.mxu0 %v1547
    %1680 = vmatpush.bf16.msra.mxu0 %v1545
    %1681 = vmatmul.bf16.gmra.mxu0 %v1313
    %v1682 = vpop.f32.mrf.mxu0
    %v1683 = vadd.f32 %v1670, %v1682
    %v1684 = vpop.f32.mrf.mxu0
    %1685 = vdwg.mxu0
    %v1686 = vmax.f32 %v1644, 0.0
    %v1687 = vmax.f32 %v1683, 0.0
    %v1688 = vrot.slane %v1686, 1
    %v1689 = vrot.slane %v1687, 1
    %v1690 = vmax.f32 %v1686, %v1688
    %v1691 = vmax.f32 %v1687, %v1689
    %v1692 = vld [vmem:[%s14] sm:$0x3]
    %v1693 = vpack.c.bf16 %v1690, %v1690
    %v1694 = vpack.c.bf16 %v1691, %v1691
    %vm1695 = vcmask 64512
    %v1697 = vsel %vm1695, %v1692, 0
    %vm1699 = vcmask 1043456
    %v1701 = vsel %vm1699, %v1693, 0
    %v1704 = vsel %vm1699, %v1694, 0
    %1706 = vmatpush.bf16.msra.mxu0 0
    %1707 = vmatpush.bf16.msra.mxu0 0
    %1708 = vmatpush.bf16.msra.mxu0 0
    %1709 = vmatpush.bf16.msra.mxu0 0
    %1710 = vmatpush.bf16.msra.mxu0 0
    %1711 = vmatpush.bf16.msra.mxu0 0
    %1712 = vmatpush.bf16.msra.mxu0 0
    %1713 = vmatpush.bf16.msra.mxu0 %v1701
    %1714 = vmatmul.bf16.gmra.mxu0 %v1697
    %v1715 = vpop.f32.mrf.mxu0
    %v1716 = vadd.f32 0.0, %v1715
    %v1717 = vpop.f32.mrf.mxu0
    %1718 = vdwg.mxu0
    %1719 = vmatpush.bf16.msra.mxu0 0
    %1720 = vmatpush.bf16.msra.mxu0 0
    %1721 = vmatpush.bf16.msra.mxu0 0
    %1722 = vmatpush.bf16.msra.mxu0 0
    %1723 = vmatpush.bf16.msra.mxu0 0
    %1724 = vmatpush.bf16.msra.mxu0 0
    %1725 = vmatpush.bf16.msra.mxu0 0
    %1726 = vmatpush.bf16.msra.mxu0 %v1704
    %1727 = vmatmul.bf16.gmra.mxu0 %v1697
    %v1728 = vpop.f32.mrf.mxu0
    %v1729 = vadd.f32 0.0, %v1728
    %v1730 = vpop.f32.mrf.mxu0
    %1731 = vdwg.mxu0
    %1732 = vrot.lane.b32.xlu0 %v1716, 64
    %v1733 = vpop.permute.xlu0 %1732
    %1734 = vrot.lane.b32.xlu0 %v1729, 64
    %v1735 = vpop.permute.xlu0 %1734
    %vm1736 = vcmp.lt.s32.totalorder %v499, 64
    %v1737 = vsel %vm1736, %v1733, %v1735
    %v1738 = vsel %vm1736, %v1735, %v1733
    %v1739 = vmax.f32 %v1716, %v1737
    %v1740 = vmax.f32 %v1729, %v1738
    %v1741 = vpack.c.bf16 %v1739, %v1739
    %v1742 = vpack.c.bf16 %v1740, %v1740
    %v1743 = vld [vmem:[#allocation14] sm:$0xf]
    %v1744 = vld [vmem:[#allocation14 + $0x4] sm:$0xf]
    %v1745 = vld [vmem:[#allocation14 + $0x8] sm:$0xf]
    %v1746 = vld [vmem:[#allocation14 + $0xc] sm:$0xf]
    %v1747 = vld [vmem:[#allocation14 + $0x10] sm:$0xf]
    %v1748 = vld [vmem:[#allocation14 + $0x14] sm:$0xf]
    %v1749 = vld [vmem:[#allocation14 + $0x18] sm:$0xf]
    %v1750 = vld [vmem:[#allocation14 + $0x1c] sm:$0xf]
    %v1751 = vld [vmem:[#allocation14 + $0x20] sm:$0xf]
    %v1752 = vld [vmem:[#allocation14 + $0x24] sm:$0xf]
    %v1753 = vld [vmem:[#allocation14 + $0x28] sm:$0xf]
    %v1754 = vld [vmem:[#allocation14 + $0x2c] sm:$0xf]
    %v1755 = vld [vmem:[#allocation14 + $0x30] sm:$0xf]
    %v1756 = vld [vmem:[#allocation14 + $0x34] sm:$0xf]
    %v1757 = vld [vmem:[#allocation14 + $0x38] sm:$0xf]
    %v1758 = vld [vmem:[#allocation14 + $0x3c] sm:$0xf]
    %v1759 = vld [vmem:[#allocation14 + $0x40] sm:$0xf]
    %v1760 = vld [vmem:[#allocation14 + $0x44] sm:$0xf]
    %v1761 = vld [vmem:[#allocation14 + $0x48] sm:$0xf]
    %v1762 = vld [vmem:[#allocation14 + $0x4c] sm:$0xf]
    %v1763 = vld [vmem:[#allocation14 + $0x50] sm:$0xf]
    %v1764 = vld [vmem:[#allocation14 + $0x54] sm:$0xf]
    %v1765 = vld [vmem:[#allocation14 + $0x58] sm:$0xf]
    %v1766 = vld [vmem:[#allocation14 + $0x5c] sm:$0xf]
    %v1767 = vld [vmem:[#allocation14 + $0x60] sm:$0xf]
    %v1768 = vld [vmem:[#allocation14 + $0x64] sm:$0xf]
    %v1769 = vld [vmem:[#allocation14 + $0x68] sm:$0xf]
    %v1770 = vld [vmem:[#allocation14 + $0x6c] sm:$0xf]
    %v1771 = vld [vmem:[#allocation14 + $0x70] sm:$0xf]
    %v1772 = vld [vmem:[#allocation14 + $0x74] sm:$0xf]
    %v1773 = vld [vmem:[#allocation14 + $0x78] sm:$0xf]
    %v1774 = vld [vmem:[#allocation14 + $0x7c] sm:$0xf]
    %v1807 = vunpack.c.l.b16 %v1743
    %v1808 = vunpack.c.l.b16 %v1744
    %v1809 = vunpack.c.l.b16 %v1745
    %v1810 = vunpack.c.l.b16 %v1746
    %v1811 = vunpack.c.l.b16 %v1747
    %v1812 = vunpack.c.l.b16 %v1748
    %v1813 = vunpack.c.l.b16 %v1749
    %v1814 = vunpack.c.l.b16 %v1750
    %v1815 = vunpack.c.l.b16 %v1751
    %v1816 = vunpack.c.l.b16 %v1752
    %v1817 = vunpack.c.l.b16 %v1753
    %v1818 = vunpack.c.l.b16 %v1754
    %v1819 = vunpack.c.l.b16 %v1755
    %v1820 = vunpack.c.l.b16 %v1756
    %v1821 = vunpack.c.l.b16 %v1757
    %v1822 = vunpack.c.l.b16 %v1758
    %v1823 = vunpack.c.l.b16 %v1759
    %v1824 = vunpack.c.l.b16 %v1760
    %v1825 = vunpack.c.l.b16 %v1761
    %v1826 = vunpack.c.l.b16 %v1762
    %v1827 = vunpack.c.l.b16 %v1763
    %v1828 = vunpack.c.l.b16 %v1764
    %v1829 = vunpack.c.l.b16 %v1765
    %v1830 = vunpack.c.l.b16 %v1766
    %v1831 = vunpack.c.l.b16 %v1767
    %v1832 = vunpack.c.l.b16 %v1768
    %v1833 = vunpack.c.l.b16 %v1769
    %v1834 = vunpack.c.l.b16 %v1770
    %v1835 = vunpack.c.l.b16 %v1771
    %v1836 = vunpack.c.l.b16 %v1772
    %v1837 = vunpack.c.l.b16 %v1773
    %v1838 = vunpack.c.l.b16 %v1774
    %v1839 = vpack.c.b16 %v1808, %v1807
    %v1840 = vpack.c.b16 %v1810, %v1809
    %v1841 = vpack.c.b16 %v1812, %v1811
    %v1842 = vpack.c.b16 %v1814, %v1813
    %v1843 = vpack.c.b16 %v1816, %v1815
    %v1844 = vpack.c.b16 %v1818, %v1817
    %v1845 = vpack.c.b16 %v1820, %v1819
    %v1846 = vpack.c.b16 %v1822, %v1821
    %v1847 = vpack.c.b16 %v1824, %v1823
    %v1848 = vpack.c.b16 %v1826, %v1825
    %v1849 = vpack.c.b16 %v1828, %v1827
    %v1850 = vpack.c.b16 %v1830, %v1829
    %v1851 = vpack.c.b16 %v1832, %v1831
    %v1852 = vpack.c.b16 %v1834, %v1833
    %v1853 = vpack.c.b16 %v1836, %v1835
    %v1854 = vpack.c.b16 %v1838, %v1837
    %1871 = vmatpush.bf16.msra.mxu0 %v1846
    %1872 = vmatpush.bf16.msra.mxu0 %v1845
    %1873 = vmatpush.bf16.msra.mxu0 %v1844
    %1874 = vmatpush.bf16.msra.mxu0 %v1843
    %1875 = vmatpush.bf16.msra.mxu0 %v1842
    %1876 = vmatpush.bf16.msra.mxu0 %v1841
    %1877 = vmatpush.bf16.msra.mxu0 %v1840
    %1878 = vmatpush.bf16.msra.mxu0 %v1839
    %1879 = vmatmul.bf16.gmra.mxu0 %v1741
    %v1880 = vpop.f32.mrf.mxu0
    %v1881 = vadd.f32 0.0, %v1880
    %v1882 = vpop.f32.mrf.mxu0
    %1883 = vdwg.mxu0
    %1884 = vmatpush.bf16.msra.mxu0 %v1854
    %1885 = vmatpush.bf16.msra.mxu0 %v1853
    %1886 = vmatpush.bf16.msra.mxu0 %v1852
    %1887 = vmatpush.bf16.msra.mxu0 %v1851
    %1888 = vmatpush.bf16.msra.mxu0 %v1850
    %1889 = vmatpush.bf16.msra.mxu0 %v1849
    %1890 = vmatpush.bf16.msra.mxu0 %v1848
    %1891 = vmatpush.bf16.msra.mxu0 %v1847
    %1892 = vmatmul.bf16.gmra.mxu0 %v1742
    %v1893 = vpop.f32.mrf.mxu0
    %v1894 = vadd.f32 %v1881, %v1893
    %v1895 = vpop.f32.mrf.mxu0
    %1896 = vdwg.mxu0
    %s1897 = sshll.u32 %s1294, 4
    %1898 = dma.done %s199, %s1897
    %v1900 = vrot.slane %v1894, 7
    %vm1902 = vcmask 1040384
    %v1903 = vsel %vm1902, 0.0, %v1900
    %v1904 = vld [vmem:[%s18] sm:$0xf]
    %1906 = vset.pattern.permute.xlu0 0
    %1907 = vperm.xlu0 %1906, %v1904
    %v1908 = vpop.permute.xlu0 %1907
    %v1910 = vmul.f32 %v1903, %v1908
    %v1911 = vrot.slane %v1894, 1
    %vm1913 = vcmask 1042432
    %v1914 = vsel %vm1913, %v1911, 0.0
    %1915 = vset.pattern.permute.xlu0 1
    %1916 = vperm.xlu0 %1915, %v1904
    %v1917 = vpop.permute.xlu0 %1916
    %v1919 = vmul.f32 %v1914, %v1917
    %v1920 = vpack.c.bf16 %v1910, %v1910
    %v1921 = vpack.c.bf16 %v1894, %v1894
    %v1922 = vpack.c.bf16 %v1919, %v1919
    %v1923 = vld [vmem:[#allocation3] sm:$0xff]
    %v1924 = vld [vmem:[#allocation3 + $0x8] sm:$0xff]
    %v1925 = vld [vmem:[#allocation3 + $0x10] sm:$0xff]
    %v1926 = vld [vmem:[#allocation3 + $0x18] sm:$0xff]
    %v1927 = vld [vmem:[#allocation3 + $0x20] sm:$0xff]
    %v1928 = vld [vmem:[#allocation3 + $0x28] sm:$0xff]
    %v1929 = vld [vmem:[#allocation3 + $0x30] sm:$0xff]
    %v1930 = vld [vmem:[#allocation3 + $0x38] sm:$0xff]
    %v1931 = vld [vmem:[#allocation3 + $0x40] sm:$0xff]
    %v1932 = vld [vmem:[#allocation3 + $0x48] sm:$0xff]
    %v1933 = vld [vmem:[#allocation3 + $0x50] sm:$0xff]
    %v1934 = vld [vmem:[#allocation3 + $0x58] sm:$0xff]
    %v1935 = vld [vmem:[#allocation3 + $0x60] sm:$0xff]
    %v1936 = vld [vmem:[#allocation3 + $0x68] sm:$0xff]
    %v1937 = vld [vmem:[#allocation3 + $0x70] sm:$0xff]
    %v1938 = vld [vmem:[#allocation3 + $0x78] sm:$0xff]
    %v1939 = vld [vmem:[#allocation3 + $0x80] sm:$0xff]
    %v1940 = vld [vmem:[#allocation3 + $0x88] sm:$0xff]
    %v1941 = vld [vmem:[#allocation3 + $0x90] sm:$0xff]
    %v1942 = vld [vmem:[#allocation3 + $0x98] sm:$0xff]
    %v1943 = vld [vmem:[#allocation3 + $0xa0] sm:$0xff]
    %v1944 = vld [vmem:[#allocation3 + $0xa8] sm:$0xff]
    %v1945 = vld [vmem:[#allocation3 + $0xb0] sm:$0xff]
    %v1946 = vld [vmem:[#allocation3 + $0xb8] sm:$0xff]
    %v1947 = vld [vmem:[#allocation3 + $0xc0] sm:$0xff]
    %v1948 = vld [vmem:[#allocation3 + $0xc8] sm:$0xff]
    %v1949 = vld [vmem:[#allocation3 + $0xd0] sm:$0xff]
    %v1950 = vld [vmem:[#allocation3 + $0xd8] sm:$0xff]
    %v1951 = vld [vmem:[#allocation3 + $0xe0] sm:$0xff]
    %v1952 = vld [vmem:[#allocation3 + $0xe8] sm:$0xff]
    %v1953 = vld [vmem:[#allocation3 + $0xf0] sm:$0xff]
    %v1954 = vld [vmem:[#allocation3 + $0xf8] sm:$0xff]
    %v1955 = vld [vmem:[#allocation3 + $0x100] sm:$0xff]
    %v1956 = vld [vmem:[#allocation3 + $0x108] sm:$0xff]
    %v1957 = vld [vmem:[#allocation3 + $0x110] sm:$0xff]
    %v1958 = vld [vmem:[#allocation3 + $0x118] sm:$0xff]
    %v1959 = vld [vmem:[#allocation3 + $0x120] sm:$0xff]
    %v1960 = vld [vmem:[#allocation3 + $0x128] sm:$0xff]
    %v1961 = vld [vmem:[#allocation3 + $0x130] sm:$0xff]
    %v1962 = vld [vmem:[#allocation3 + $0x138] sm:$0xff]
    %v1963 = vld [vmem:[#allocation3 + $0x140] sm:$0xff]
    %v1964 = vld [vmem:[#allocation3 + $0x148] sm:$0xff]
    %v1965 = vld [vmem:[#allocation3 + $0x150] sm:$0xff]
    %v1966 = vld [vmem:[#allocation3 + $0x158] sm:$0xff]
    %v1967 = vld [vmem:[#allocation3 + $0x160] sm:$0xff]
    %v1968 = vld [vmem:[#allocation3 + $0x168] sm:$0xff]
    %v1969 = vld [vmem:[#allocation3 + $0x170] sm:$0xff]
    %v1970 = vld [vmem:[#allocation3 + $0x178] sm:$0xff]
    %v1971 = vld [vmem:[#allocation16] sm:$0x3]
    %v1973 = vperm.slane %v1971, 0
    %v1974 = vperm.slane %v1971, 1
    %v2025 = vunpack.c.l.b16 %v1923
    %v2026 = vunpack.c.h.b16 %v1923
    %v2027 = vunpack.c.l.b16 %v1924
    %v2028 = vunpack.c.h.b16 %v1924
    %v2029 = vunpack.c.l.b16 %v1925
    %v2030 = vunpack.c.h.b16 %v1925
    %v2031 = vunpack.c.l.b16 %v1926
    %v2032 = vunpack.c.h.b16 %v1926
    %v2033 = vunpack.c.l.b16 %v1927
    %v2034 = vunpack.c.h.b16 %v1927
    %v2035 = vunpack.c.l.b16 %v1928
    %v2036 = vunpack.c.h.b16 %v1928
    %v2037 = vunpack.c.l.b16 %v1929
    %v2038 = vunpack.c.h.b16 %v1929
    %v2039 = vunpack.c.l.b16 %v1930
    %v2040 = vunpack.c.h.b16 %v1930
    %v2041 = vunpack.c.l.b16 %v1931
    %v2042 = vunpack.c.h.b16 %v1931
    %v2043 = vunpack.c.l.b16 %v1932
    %v2044 = vunpack.c.h.b16 %v1932
    %v2045 = vunpack.c.l.b16 %v1933
    %v2046 = vunpack.c.h.b16 %v1933
    %v2047 = vunpack.c.l.b16 %v1934
    %v2048 = vunpack.c.h.b16 %v1934
    %v2049 = vunpack.c.l.b16 %v1935
    %v2050 = vunpack.c.h.b16 %v1935
    %v2051 = vunpack.c.l.b16 %v1936
    %v2052 = vunpack.c.h.b16 %v1936
    %v2053 = vunpack.c.l.b16 %v1937
    %v2054 = vunpack.c.h.b16 %v1937
    %v2055 = vunpack.c.l.b16 %v1938
    %v2056 = vunpack.c.h.b16 %v1938
    %v2057 = vunpack.c.l.b16 %v1939
    %v2058 = vunpack.c.h.b16 %v1939
    %v2059 = vunpack.c.l.b16 %v1940
    %v2060 = vunpack.c.h.b16 %v1940
    %v2061 = vunpack.c.l.b16 %v1941
    %v2062 = vunpack.c.h.b16 %v1941
    %v2063 = vunpack.c.l.b16 %v1942
    %v2064 = vunpack.c.h.b16 %v1942
    %v2065 = vunpack.c.l.b16 %v1943
    %v2066 = vunpack.c.h.b16 %v1943
    %v2067 = vunpack.c.l.b16 %v1944
    %v2068 = vunpack.c.h.b16 %v1944
    %v2069 = vunpack.c.l.b16 %v1945
    %v2070 = vunpack.c.h.b16 %v1945
    %v2071 = vunpack.c.l.b16 %v1946
    %v2072 = vunpack.c.h.b16 %v1946
    %v2073 = vunpack.c.l.b16 %v1947
    %v2074 = vunpack.c.h.b16 %v1947
    %v2075 = vunpack.c.l.b16 %v1948
    %v2076 = vunpack.c.h.b16 %v1948
    %v2077 = vunpack.c.l.b16 %v1949
    %v2078 = vunpack.c.h.b16 %v1949
    %v2079 = vunpack.c.l.b16 %v1950
    %v2080 = vunpack.c.h.b16 %v1950
    %v2081 = vunpack.c.l.b16 %v1951
    %v2082 = vunpack.c.h.b16 %v1951
    %v2083 = vunpack.c.l.b16 %v1952
    %v2084 = vunpack.c.h.b16 %v1952
    %v2085 = vunpack.c.l.b16 %v1953
    %v2086 = vunpack.c.h.b16 %v1953
    %v2087 = vunpack.c.l.b16 %v1954
    %v2088 = vunpack.c.h.b16 %v1954
    %v2089 = vunpack.c.l.b16 %v1955
    %v2090 = vunpack.c.h.b16 %v1955
    %v2091 = vunpack.c.l.b16 %v1956
    %v2092 = vunpack.c.h.b16 %v1956
    %v2093 = vunpack.c.l.b16 %v1957
    %v2094 = vunpack.c.h.b16 %v1957
    %v2095 = vunpack.c.l.b16 %v1958
    %v2096 = vunpack.c.h.b16 %v1958
    %v2097 = vunpack.c.l.b16 %v1959
    %v2098 = vunpack.c.h.b16 %v1959
    %v2099 = vunpack.c.l.b16 %v1960
    %v2100 = vunpack.c.h.b16 %v1960
    %v2101 = vunpack.c.l.b16 %v1961
    %v2102 = vunpack.c.h.b16 %v1961
    %v2103 = vunpack.c.l.b16 %v1962
    %v2104 = vunpack.c.h.b16 %v1962
    %v2105 = vunpack.c.l.b16 %v1963
    %v2106 = vunpack.c.h.b16 %v1963
    %v2107 = vunpack.c.l.b16 %v1964
    %v2108 = vunpack.c.h.b16 %v1964
    %v2109 = vunpack.c.l.b16 %v1965
    %v2110 = vunpack.c.h.b16 %v1965
    %v2111 = vunpack.c.l.b16 %v1966
    %v2112 = vunpack.c.h.b16 %v1966
    %v2113 = vunpack.c.l.b16 %v1967
    %v2114 = vunpack.c.h.b16 %v1967
    %v2115 = vunpack.c.l.b16 %v1968
    %v2116 = vunpack.c.h.b16 %v1968
    %v2117 = vunpack.c.l.b16 %v1969
    %v2118 = vunpack.c.h.b16 %v1969
    %v2119 = vunpack.c.l.b16 %v1970
    %v2120 = vunpack.c.h.b16 %v1970
    %v2121 = vpack.c.b16 %v2027, %v2025
    %v2122 = vpack.c.b16 %v2028, %v2026
    %v2123 = vpack.c.b16 %v2031, %v2029
    %v2124 = vpack.c.b16 %v2032, %v2030
    %v2125 = vpack.c.b16 %v2035, %v2033
    %v2126 = vpack.c.b16 %v2036, %v2034
    %v2127 = vpack.c.b16 %v2039, %v2037
    %v2128 = vpack.c.b16 %v2040, %v2038
    %v2129 = vpack.c.b16 %v2043, %v2041
    %v2130 = vpack.c.b16 %v2044, %v2042
    %v2131 = vpack.c.b16 %v2047, %v2045
    %v2132 = vpack.c.b16 %v2048, %v2046
    %v2133 = vpack.c.b16 %v2051, %v2049
    %v2134 = vpack.c.b16 %v2052, %v2050
    %v2135 = vpack.c.b16 %v2055, %v2053
    %v2136 = vpack.c.b16 %v2056, %v2054
    %v2137 = vpack.c.b16 %v2059, %v2057
    %v2138 = vpack.c.b16 %v2060, %v2058
    %v2139 = vpack.c.b16 %v2063, %v2061
    %v2140 = vpack.c.b16 %v2064, %v2062
    %v2141 = vpack.c.b16 %v2067, %v2065
    %v2142 = vpack.c.b16 %v2068, %v2066
    %v2143 = vpack.c.b16 %v2071, %v2069
    %v2144 = vpack.c.b16 %v2072, %v2070
    %v2145 = vpack.c.b16 %v2075, %v2073
    %v2146 = vpack.c.b16 %v2076, %v2074
    %v2147 = vpack.c.b16 %v2079, %v2077
    %v2148 = vpack.c.b16 %v2080, %v2078
    %v2149 = vpack.c.b16 %v2083, %v2081
    %v2150 = vpack.c.b16 %v2084, %v2082
    %v2151 = vpack.c.b16 %v2087, %v2085
    %v2152 = vpack.c.b16 %v2088, %v2086
    %v2153 = vpack.c.b16 %v2091, %v2089
    %v2154 = vpack.c.b16 %v2092, %v2090
    %v2155 = vpack.c.b16 %v2095, %v2093
    %v2156 = vpack.c.b16 %v2096, %v2094
    %v2157 = vpack.c.b16 %v2099, %v2097
    %v2158 = vpack.c.b16 %v2100, %v2098
    %v2159 = vpack.c.b16 %v2103, %v2101
    %v2160 = vpack.c.b16 %v2104, %v2102
    %v2161 = vpack.c.b16 %v2107, %v2105
    %v2162 = vpack.c.b16 %v2108, %v2106
    %v2163 = vpack.c.b16 %v2111, %v2109
    %v2164 = vpack.c.b16 %v2112, %v2110
    %v2165 = vpack.c.b16 %v2115, %v2113
    %v2166 = vpack.c.b16 %v2116, %v2114
    %v2167 = vpack.c.b16 %v2119, %v2117
    %v2168 = vpack.c.b16 %v2120, %v2118
    %2217 = vmatpush.bf16.msra.mxu0 %v2135
    %2218 = vmatpush.bf16.msra.mxu0 %v2133
    %2219 = vmatpush.bf16.msra.mxu0 %v2131
    %2220 = vmatpush.bf16.msra.mxu0 %v2129
    %2221 = vmatpush.bf16.msra.mxu0 %v2127
    %2222 = vmatpush.bf16.msra.mxu0 %v2125
    %2223 = vmatpush.bf16.msra.mxu0 %v2123
    %2224 = vmatpush.bf16.msra.mxu0 %v2121
    %2225 = vmatmul.bf16.gmra.mxu0 %v1920
    %v2226 = vpop.f32.mrf.mxu0
    %v2227 = vadd.f32 %v1973, %v2226
    %v2228 = vpop.f32.mrf.mxu0
    %2229 = vdwg.mxu0
    %2230 = vmatpush.bf16.msra.mxu0 %v2151
    %2231 = vmatpush.bf16.msra.mxu0 %v2149
    %2232 = vmatpush.bf16.msra.mxu0 %v2147
    %2233 = vmatpush.bf16.msra.mxu0 %v2145
    %2234 = vmatpush.bf16.msra.mxu0 %v2143
    %2235 = vmatpush.bf16.msra.mxu0 %v2141
    %2236 = vmatpush.bf16.msra.mxu0 %v2139
    %2237 = vmatpush.bf16.msra.mxu0 %v2137
    %2238 = vmatmul.bf16.gmra.mxu0 %v1921
    %v2239 = vpop.f32.mrf.mxu0
    %v2240 = vadd.f32 %v2227, %v2239
    %v2241 = vpop.f32.mrf.mxu0
    %2242 = vdwg.mxu0
    %2243 = vmatpush.bf16.msra.mxu0 %v2167
    %2244 = vmatpush.bf16.msra.mxu0 %v2165
    %2245 = vmatpush.bf16.msra.mxu0 %v2163
    %2246 = vmatpush.bf16.msra.mxu0 %v2161
    %2247 = vmatpush.bf16.msra.mxu0 %v2159
    %2248 = vmatpush.bf16.msra.mxu0 %v2157
    %2249 = vmatpush.bf16.msra.mxu0 %v2155
    %2250 = vmatpush.bf16.msra.mxu0 %v2153
    %2251 = vmatmul.bf16.gmra.mxu0 %v1922
    %v2252 = vpop.f32.mrf.mxu0
    %v2253 = vadd.f32 %v2240, %v2252
    %v2254 = vpop.f32.mrf.mxu0
    %2255 = vdwg.mxu0
    %2256 = vmatpush.bf16.msra.mxu0 %v2136
    %2257 = vmatpush.bf16.msra.mxu0 %v2134
    %2258 = vmatpush.bf16.msra.mxu0 %v2132
    %2259 = vmatpush.bf16.msra.mxu0 %v2130
    %2260 = vmatpush.bf16.msra.mxu0 %v2128
    %2261 = vmatpush.bf16.msra.mxu0 %v2126
    %2262 = vmatpush.bf16.msra.mxu0 %v2124
    %2263 = vmatpush.bf16.msra.mxu0 %v2122
    %2264 = vmatmul.bf16.gmra.mxu0 %v1920
    %v2265 = vpop.f32.mrf.mxu0
    %v2266 = vadd.f32 %v1974, %v2265
    %v2267 = vpop.f32.mrf.mxu0
    %2268 = vdwg.mxu0
    %2269 = vmatpush.bf16.msra.mxu0 %v2152
    %2270 = vmatpush.bf16.msra.mxu0 %v2150
    %2271 = vmatpush.bf16.msra.mxu0 %v2148
    %2272 = vmatpush.bf16.msra.mxu0 %v2146
    %2273 = vmatpush.bf16.msra.mxu0 %v2144
    %2274 = vmatpush.bf16.msra.mxu0 %v2142
    %2275 = vmatpush.bf16.msra.mxu0 %v2140
    %2276 = vmatpush.bf16.msra.mxu0 %v2138
    %2277 = vmatmul.bf16.gmra.mxu0 %v1921
    %v2278 = vpop.f32.mrf.mxu0
    %v2279 = vadd.f32 %v2266, %v2278
    %v2280 = vpop.f32.mrf.mxu0
    %2281 = vdwg.mxu0
    %2282 = vmatpush.bf16.msra.mxu0 %v2168
    %2283 = vmatpush.bf16.msra.mxu0 %v2166
    %2284 = vmatpush.bf16.msra.mxu0 %v2164
    %2285 = vmatpush.bf16.msra.mxu0 %v2162
    %2286 = vmatpush.bf16.msra.mxu0 %v2160
    %2287 = vmatpush.bf16.msra.mxu0 %v2158
    %2288 = vmatpush.bf16.msra.mxu0 %v2156
    %2289 = vmatpush.bf16.msra.mxu0 %v2154
    %2290 = vmatmul.bf16.gmra.mxu0 %v1922
    %v2291 = vpop.f32.mrf.mxu0
    %v2292 = vadd.f32 %v2279, %v2291
    %v2293 = vpop.f32.mrf.mxu0
    %2294 = vdwg.mxu0
    %v2295 = vmax.f32 %v2253, 0.0
    %v2296 = vmax.f32 %v2292, 0.0
    %v2297 = vadd.f32 %v2295, %v2296
    %v2298 = vld [vmem:[%s19] sm:$0x1]
    %v2299 = vpack.c.bf16 %v2297, %v2297
    %vm2300 = vcmask 31744
    %v2302 = vsel %vm2300, %v2298, 0
    %vm2304 = vcmask 1041408
    %v2306 = vsel %vm2304, %v2299, 0
    %2308 = vmatpush.bf16.msra.mxu0 0
    %2309 = vmatpush.bf16.msra.mxu0 0
    %2310 = vmatpush.bf16.msra.mxu0 0
    %2311 = vmatpush.bf16.msra.mxu0 0
    %2312 = vmatpush.bf16.msra.mxu0 0
    %2313 = vmatpush.bf16.msra.mxu0 0
    %2314 = vmatpush.bf16.msra.mxu0 0
    %2315 = vmatpush.bf16.msra.mxu0 %v2306
    %2316 = vmatmul.bf16.gmra.mxu0 %v2302
    %v2317 = vpop.f32.mrf.mxu0
    %v2318 = vadd.f32 0.0, %v2317
    %v2319 = vpop.f32.mrf.mxu0
    %2320 = vdwg.mxu0
    %v2321 = vld [vmem:[%s20] sm:$0xff]
    %v2322 = vld [vmem:[%s20 + $0x8] sm:$0xff]
    %v2323 = vld [vmem:[%s20 + $0x10] sm:$0xff]
    %v2324 = vld [vmem:[%s20 + $0x18] sm:$0xff]
    %v2325 = vld [vmem:[%s20 + $0x20] sm:$0xff]
    %v2326 = vld [vmem:[%s20 + $0x28] sm:$0xff]
    %v2327 = vld [vmem:[%s20 + $0x30] sm:$0xff]
    %v2328 = vld [vmem:[%s20 + $0x38] sm:$0xff]
    %v2329 = vld [vmem:[%s20 + $0x40] sm:$0xff]
    %v2330 = vld [vmem:[%s20 + $0x48] sm:$0xff]
    %v2331 = vld [vmem:[%s20 + $0x50] sm:$0xff]
    %v2332 = vld [vmem:[%s20 + $0x58] sm:$0xff]
    %v2333 = vld [vmem:[%s20 + $0x60] sm:$0xff]
    %v2334 = vld [vmem:[%s20 + $0x68] sm:$0xff]
    %v2335 = vld [vmem:[%s20 + $0x70] sm:$0xff]
    %v2336 = vld [vmem:[%s20 + $0x78] sm:$0xff]
    %v2337 = vld [vmem:[#allocation17] sm:$0x1]
    %v2339 = vperm.slane %v2337, 0
    %2341 = vmatpush.msra.mxu0 %v2336
    %2342 = vmatpush.msra.mxu0 %v2335
    %2343 = vmatpush.msra.mxu0 %v2334
    %2344 = vmatpush.msra.mxu0 %v2333
    %2345 = vmatpush.msra.mxu0 %v2332
    %2346 = vmatpush.msra.mxu0 %v2331
    %2347 = vmatpush.msra.mxu0 %v2330
    %2348 = vmatpush.msra.mxu0 %v2329
    %2349 = vmatpush.msra.mxu0 %v2328
    %2350 = vmatpush.msra.mxu0 %v2327
    %2351 = vmatpush.msra.mxu0 %v2326
    %2352 = vmatpush.msra.mxu0 %v2325
    %2353 = vmatpush.msra.mxu0 %v2324
    %2354 = vmatpush.msra.mxu0 %v2323
    %2355 = vmatpush.msra.mxu0 %v2322
    %2356 = vmatpush.msra.mxu0 %v2321
    %2357 = vmatmul.f32.gmra.mxu0 %v2318
    %v2358 = vpop.f32.mrf.mxu0
    %v2359 = vadd.f32 %v2339, %v2358
    %2360 = vdwg.mxu0
    %vm2361 = vcmask 9216
    %2362 = vst.msk [vmem:[#allocation19] sm:$0x3] %vm2361, %v2359
    // Predicated region
    $region122: #{baseline_forward.1} parent=1 // pred_check
      _
    $region123: #{baseline_forward.1} parent=1 // pred_check_branch
      %2364 = sbr.rel (0) target = $region125
    $region124: #{baseline_forward.1} parent=1 // pred_region
      %2366 = vsyncadd [#allocation7], 0
      %s2368 = sshll.u32 [#allocation19], 4
      %s2369 = int_to_ptr.vmem [resolvable:$true] %s2368
      %s2370 = sshll.u32 %s22, 4
      %s2371 = int_to_ptr.hbm [resolvable:$true] %s2370
      %2373 = dma.vmem_to_hbm [thread:$0]  %s2369, 32, %s2371, [#allocation7]
    $region125: #{baseline_forward.1} parent=1 // pred_fallthru
      _
    // Predicated region
    $region126: #{baseline_forward.1} parent=1 // pred_check
      _
    $region127: #{baseline_forward.1} parent=1 // pred_check_branch
      %2375 = sbr.rel (0) target = $region129
    $region128: #{baseline_forward.1} parent=1 // pred_region
      %2377 = dma.done [#allocation7], 32
    $region129: #{baseline_forward.1} parent=1 // pred_fallthru
      _
    %2378 = vsyncpa [#allocation6], 1
    %2379 = vsyncpa [#allocation9], 1
    %2380 = vsyncpa [#allocation12], 1
    %2381 = vsyncpa [#allocation15], 1
    %2382 = vsyncpa [#allocation18], 1
    %2383 = vsyncpa [#allocation7], 1
  %2384 = vsyncmov [#allocation4]
  %s2385 = vpop.sfrf %2384
  %p2386 = scmp.eq.s32.totalorder %s2385, 0
  %p2387 = pneg %p2386
  %2389 = shalt.err (%p2387)
  %s2390 = scalar_lea.sflag [#allocation4], 1
  %2391 = vsyncmov %s2390
  %s2392 = vpop.sfrf %2391
  %p2393 = scmp.eq.s32.totalorder %s2392, 0
  %p2394 = pneg %p2393
  %2396 = shalt.err (%p2394)

</llo_original>
